<compile_context>
chip_gen: v6e
topology: v6e:2x2x1
jax: 0.10.0
libtpu: 0.0.40
codegen_flags: <defaults>
</compile_context>

<pallas_src>
import functools

import jax
import jax.numpy as jnp
from jax.experimental import pallas as pl
from jax.experimental.pallas import tpu as pltpu


def _round_up(n, m):
    return ((n + m - 1) // m) * m


def _vmem_capacity_bytes():
    try:
        return int(pltpu.get_tpu_info().vmem_capacity_bytes)
    except Exception:
        return 64 * 1024 * 1024  # conservative (v7x per-TC capacity)


def _autoencoder_kernel(x_ref,
                        w1_ref, b1_ref,
                        w2_ref, b2_ref,
                        w3_ref, b3_ref,
                        w4_ref, b4_ref,
                        o_ref, *, row_chunk):
    """Fused 4-layer MLP (2-layer encoder + 2-layer decoder) for one batch tile.

    Matmul operands are bf16 (MXU native), accumulation + bias + ReLU in f32.
    The batch tile is processed in <=256-row sub-chunks so intermediates stay in
    vregs even when the DMA tile is large.
    """
    tile = x_ref.shape[0]
    for start in range(0, tile, row_chunk):      # static unrolled loop (small)
        rc = min(row_chunk, tile - start)
        rows = pl.ds(start, rc)

        x = x_ref[rows, :].astype(w1_ref.dtype)  # f32 -> bf16 in-kernel

        # encoder
        h = jnp.dot(x, w1_ref[...], preferred_element_type=jnp.float32) + b1_ref[...]
        h = jnp.maximum(h, 0.0).astype(w2_ref.dtype)
        z = jnp.dot(h, w2_ref[...], preferred_element_type=jnp.float32) + b2_ref[...]
        z = jnp.maximum(z, 0.0).astype(w3_ref.dtype)

        # decoder
        d = jnp.dot(z, w3_ref[...], preferred_element_type=jnp.float32) + b3_ref[...]
        d = jnp.maximum(d, 0.0).astype(w4_ref.dtype)
        y = jnp.dot(d, w4_ref[...], preferred_element_type=jnp.float32) + b4_ref[...]

        o_ref[rows, :] = y.astype(o_ref.dtype)


def prepare_params(params, compute_dtype=jnp.bfloat16):
    """One-time pad (hidden dims -> multiples of 128) + cast of the weights.

    Zero padding is exact (padded activation columns stay exactly 0 through
    every ReLU/matmul), so results match the unpadded reference.  The returned
    dict should be reused across forward calls.
    """
    D, H = params["w1"].shape
    H2 = params["w2"].shape[1]
    H_p = _round_up(max(H, 128), 128)
    H2_p = _round_up(max(H2, 128), 128)

    def pad2(a, rows, cols, dtype):
        return jnp.pad(a, ((0, rows - a.shape[0]), (0, cols - a.shape[1]))).astype(dtype)

    return {
        "w1": pad2(params["w1"], D,    H_p,  compute_dtype),
        "b1": pad2(params["b1"], 1,    H_p,  jnp.float32),
        "w2": pad2(params["w2"], H_p,  H2_p, compute_dtype),
        "b2": pad2(params["b2"], 1,    H2_p, jnp.float32),
        "w3": pad2(params["w3"], H2_p, H_p,  compute_dtype),
        "b3": pad2(params["b3"], 1,    H_p,  jnp.float32),
        "w4": pad2(params["w4"], H_p,  D,    compute_dtype),
        "b4": pad2(params["b4"], 1,    D,    jnp.float32),
    }


@functools.partial(jax.jit, static_argnames=("batch_tile", "single_buffer_weights"))
def autoencoder_forward(x, prepped, *, batch_tile=256, single_buffer_weights=True):
    """Autoencoder forward pass as a single fused Pallas kernel.

    x: (B, input_dim) float32.  prepped: output of prepare_params().
    Returns (B, input_dim) float32 (no padding, no wrapper slice).
    """
    B, D = x.shape
    H_p = prepped["w1"].shape[1]
    H2_p = prepped["w2"].shape[1]
    assert prepped["w4"].shape[1] == D

    # ---- batch tile: as large as allowed (single-TC parts want few, big steps).
    if B <= batch_tile:
        tile = B                               # full dim -> no (8,·) constraint
    else:
        tile = max(8, (batch_tile // 8) * 8)
    # Only split for multiple TensorCores (v7x megacore); harmless no-op otherwise.
    num_tc = getattr(jax.devices()[0], "num_cores", 1) or 1
    if num_tc > 1 and pl.cdiv(B, tile) < num_tc and B >= 8 * num_tc:
        tile = min(tile, _round_up(pl.cdiv(B, num_tc), 8))
    grid = (pl.cdiv(B, tile),)
    row_chunk = min(tile, 256)                 # bound vreg pressure per matmul

    # TODO(synk): for very large input_dim/hidden (padded weights > ~16-20 MiB on
    # v7x, ~40-48 MiB on v5e/v6e), add an output-feature grid axis that tiles the
    # weight N-dim instead of keeping whole weights resident.

    # ---- constant (grid-invariant) weight/bias blocks; single-buffered if supported.
    def const_spec(arr):
        idx = lambda i: (0, 0)
        if single_buffer_weights:
            return pl.BlockSpec(arr.shape, idx, pipeline_mode=pl.Buffered(1))
        return pl.BlockSpec(arr.shape, idx)

    w_bytes = sum(prepped[k].size for k in ("w1", "w2", "w3", "w4")) * 2   # bf16
    b_bytes = sum(prepped[k].size for k in ("b1", "b2", "b3", "b4")) * 4   # f32
    wf = 1 if single_buffer_weights else 2

    # ---- honest VMEM estimate, clamped to 75% of this generation's capacity.
    est_bytes = (
        2 * tile * D * 4                      # x tile (f32), double-buffered
        + 2 * tile * D * 4                    # out tile (f32), double-buffered
        + wf * (w_bytes + b_bytes)            # resident weights/biases
        + 6 * row_chunk * max(H_p, H2_p, D) * 4   # activation headroom
    )
    vmem_cap = _vmem_capacity_bytes()
    vmem_limit = int(min(max(est_bytes, 32 * 1024 * 1024), int(0.75 * vmem_cap)))

    flops = 2 * B * (D * H_p + H_p * H2_p + H2_p * H_p + H_p * D)
    bytes_accessed = B * D * 4 + w_bytes + b_bytes + B * D * 4
    cost = pl.CostEstimate(flops=flops, transcendentals=0,
                           bytes_accessed=bytes_accessed)

    kernel = functools.partial(_autoencoder_kernel, row_chunk=row_chunk)

    return pl.pallas_call(
        kernel,
        out_shape=jax.ShapeDtypeStruct((B, D), jnp.float32),
        grid_spec=pltpu.PrefetchScalarGridSpec(
            num_scalar_prefetch=0,
            grid=grid,
            in_specs=[
                pl.BlockSpec((tile, D), lambda i: (i, 0)),   # x tile (f32, unpadded)
                const_spec(prepped["w1"]), const_spec(prepped["b1"]),
                const_spec(prepped["w2"]), const_spec(prepped["b2"]),
                const_spec(prepped["w3"]), const_spec(prepped["b3"]),
                const_spec(prepped["w4"]), const_spec(prepped["b4"]),
            ],
            out_specs=pl.BlockSpec((tile, D), lambda i: (i, 0)),
        ),
        compiler_params=pltpu.CompilerParams(
            dimension_semantics=("parallel",),
            vmem_limit_bytes=vmem_limit),
        cost_estimate=cost,
    )(x,
      prepped["w1"], prepped["b1"], prepped["w2"], prepped["b2"],
      prepped["w3"], prepped["b3"], prepped["w4"], prepped["b4"])


def init_params(key, input_dim, hidden_dim, dtype=jnp.float32):
    """Deterministic init matching nn.Linear's default U(-1/sqrt(fan_in), 1/sqrt(fan_in)).

    Weights are stored transposed relative to PyTorch: shape (in, out)."""
    dims = [
        (input_dim, hidden_dim),        # encoder L1
        (hidden_dim, hidden_dim // 2),  # encoder L2
        (hidden_dim // 2, hidden_dim),  # decoder L1
        (hidden_dim, input_dim),        # decoder L2
    ]
    params = {}
    for idx, (fan_in, fan_out) in enumerate(dims, start=1):
        key, kw, kb = jax.random.split(key, 3)
        bound = 1.0 / jnp.sqrt(jnp.asarray(fan_in, dtype))
        params[f"w{idx}"] = jax.random.uniform(
            kw, (fan_in, fan_out), dtype, minval=-bound, maxval=bound)
        params[f"b{idx}"] = jax.random.uniform(
            kb, (1, fan_out), dtype, minval=-bound, maxval=bound)
    return params


def reference_forward(x, params, compute_dtype=jnp.bfloat16):
    """Pure-JAX reference using the same bf16-operand / f32-accumulate chain."""
    def lin(a, w, b):
        return jnp.dot(a.astype(compute_dtype), w.astype(compute_dtype),
                       preferred_element_type=jnp.float32) + b
    h = jnp.maximum(lin(x, params["w1"], params["b1"]), 0.0)
    z = jnp.maximum(lin(h, params["w2"], params["b2"]), 0.0)
    d = jnp.maximum(lin(z, params["w3"], params["b3"]), 0.0)
    return lin(d, params["w4"], params["b4"])


if __name__ == "__main__":
    key = jax.random.PRNGKey(0)
    input_dim, hidden_dim = 64, 32
    batch = 256

    kx, kp = jax.random.split(key)
    x = jax.random.normal(kx, (batch, input_dim), jnp.float32)
    params = init_params(kp, input_dim, hidden_dim)
    prepped = prepare_params(params)   # one-time weight pad/cast, reused per call

    try:
        out = autoencoder_forward(x, prepped)
    except Exception:
        # Fallback for JAX versions without BlockSpec pipeline_mode support.
        out = autoencoder_forward(x, prepped, single_buffer_weights=False)
    out = jax.block_until_ready(out)

    ref = reference_forward(x, params)
    assert out.shape == (batch, input_dim)
    max_err = float(jnp.max(jnp.abs(out - ref)))
    assert jnp.allclose(out, ref, atol=1e-3, rtol=1e-3), (
        f"mismatch vs JAX reference, max abs err {max_err}")

    print("KERNEL_OK")
</pallas_src>

<mosaic_0001>
module attributes {stable_mosaic.version = 11 : i64} {
  func.func @_autoencoder_kernel(%arg0: i32, %arg1: memref<256x64xf32, #tpu.memory_space<vmem>>, %arg2: memref<64x128xbf16, #tpu.memory_space<vmem>>, %arg3: memref<1x128xf32, #tpu.memory_space<vmem>>, %arg4: memref<128x128xbf16, #tpu.memory_space<vmem>>, %arg5: memref<1x128xf32, #tpu.memory_space<vmem>>, %arg6: memref<128x128xbf16, #tpu.memory_space<vmem>>, %arg7: memref<1x128xf32, #tpu.memory_space<vmem>>, %arg8: memref<128x64xbf16, #tpu.memory_space<vmem>>, %arg9: memref<1x64xf32, #tpu.memory_space<vmem>>, %arg10: memref<256x64xf32, #tpu.memory_space<vmem>>) attributes {dimension_semantics = [#tpu.dimension_semantics<parallel>], iteration_bounds = array<i64: 1>, scalar_prefetch = 0 : i64, scratch_operands = 0 : i64, tpu.core_type = #tpu.core_type<tc>, window_params = [{transform_indices = @transform_0, window_bounds = array<i64: 256, 64>}, {pipeline_mode = #tpu.pipeline_mode<synchronous>, transform_indices = @transform_1, window_bounds = array<i64: 64, 128>}, {pipeline_mode = #tpu.pipeline_mode<synchronous>, transform_indices = @transform_2, window_bounds = array<i64: 1, 128>}, {pipeline_mode = #tpu.pipeline_mode<synchronous>, transform_indices = @transform_3, window_bounds = array<i64: 128, 128>}, {pipeline_mode = #tpu.pipeline_mode<synchronous>, transform_indices = @transform_4, window_bounds = array<i64: 1, 128>}, {pipeline_mode = #tpu.pipeline_mode<synchronous>, transform_indices = @transform_5, window_bounds = array<i64: 128, 128>}, {pipeline_mode = #tpu.pipeline_mode<synchronous>, transform_indices = @transform_6, window_bounds = array<i64: 1, 128>}, {pipeline_mode = #tpu.pipeline_mode<synchronous>, transform_indices = @transform_7, window_bounds = array<i64: 128, 64>}, {pipeline_mode = #tpu.pipeline_mode<synchronous>, transform_indices = @transform_8, window_bounds = array<i64: 1, 64>}, {transform_indices = @transform_9, window_bounds = array<i64: 256, 64>}]} {
    %c0 = arith.constant 0 : index
    %c0_0 = arith.constant 0 : index
    %0 = vector.load %arg1[%c0, %c0_0] : memref<256x64xf32, #tpu.memory_space<vmem>>, vector<256x64xf32>
    %1 = arith.truncf %0 : vector<256x64xf32> to vector<256x64xbf16>
    %c0_1 = arith.constant 0 : index
    %c0_2 = arith.constant 0 : index
    %2 = vector.load %arg2[%c0_1, %c0_2] : memref<64x128xbf16, #tpu.memory_space<vmem>>, vector<64x128xbf16>
    %cst = arith.constant dense<0.000000e+00> : vector<256x128xf32>
    %3 = tpu.matmul %1, %2, %cst {dimension_numbers = #tpu.dot_dimension_numbers<[1], [0], [0], [1], [0, 0, 1, 1], [], []>} : vector<256x64xbf16>, vector<64x128xbf16>, vector<256x128xf32> -> vector<256x128xf32>
    %c0_3 = arith.constant 0 : index
    %c0_4 = arith.constant 0 : index
    %4 = vector.load %arg3[%c0_3, %c0_4] : memref<1x128xf32, #tpu.memory_space<vmem>>, vector<1x128xf32>
    %5 = vector.broadcast %4 : vector<1x128xf32> to vector<256x128xf32>
    %6 = arith.addf %3, %5 : vector<256x128xf32>
    %cst_5 = arith.constant 0.000000e+00 : f32
    %7 = vector.broadcast %cst_5 : f32 to vector<256x128xf32>
    %8 = arith.maximumf %6, %7 : vector<256x128xf32>
    %9 = arith.truncf %8 : vector<256x128xf32> to vector<256x128xbf16>
    %c0_6 = arith.constant 0 : index
    %c0_7 = arith.constant 0 : index
    %10 = vector.load %arg4[%c0_6, %c0_7] : memref<128x128xbf16, #tpu.memory_space<vmem>>, vector<128x128xbf16>
    %cst_8 = arith.constant dense<0.000000e+00> : vector<256x128xf32>
    %11 = tpu.matmul %9, %10, %cst_8 {dimension_numbers = #tpu.dot_dimension_numbers<[1], [0], [0], [1], [0, 0, 1, 1], [], []>} : vector<256x128xbf16>, vector<128x128xbf16>, vector<256x128xf32> -> vector<256x128xf32>
    %c0_9 = arith.constant 0 : index
    %c0_10 = arith.constant 0 : index
    %12 = vector.load %arg5[%c0_9, %c0_10] : memref<1x128xf32, #tpu.memory_space<vmem>>, vector<1x128xf32>
    %13 = vector.broadcast %12 : vector<1x128xf32> to vector<256x128xf32>
    %14 = arith.addf %11, %13 : vector<256x128xf32>
    %cst_11 = arith.constant 0.000000e+00 : f32
    %15 = vector.broadcast %cst_11 : f32 to vector<256x128xf32>
    %16 = arith.maximumf %14, %15 : vector<256x128xf32>
    %17 = arith.truncf %16 : vector<256x128xf32> to vector<256x128xbf16>
    %c0_12 = arith.constant 0 : index
    %c0_13 = arith.constant 0 : index
    %18 = vector.load %arg6[%c0_12, %c0_13] : memref<128x128xbf16, #tpu.memory_space<vmem>>, vector<128x128xbf16>
    %cst_14 = arith.constant dense<0.000000e+00> : vector<256x128xf32>
    %19 = tpu.matmul %17, %18, %cst_14 {dimension_numbers = #tpu.dot_dimension_numbers<[1], [0], [0], [1], [0, 0, 1, 1], [], []>} : vector<256x128xbf16>, vector<128x128xbf16>, vector<256x128xf32> -> vector<256x128xf32>
    %c0_15 = arith.constant 0 : index
    %c0_16 = arith.constant 0 : index
    %20 = vector.load %arg7[%c0_15, %c0_16] : memref<1x128xf32, #tpu.memory_space<vmem>>, vector<1x128xf32>
    %21 = vector.broadcast %20 : vector<1x128xf32> to vector<256x128xf32>
    %22 = arith.addf %19, %21 : vector<256x128xf32>
    %cst_17 = arith.constant 0.000000e+00 : f32
    %23 = vector.broadcast %cst_17 : f32 to vector<256x128xf32>
    %24 = arith.maximumf %22, %23 : vector<256x128xf32>
    %25 = arith.truncf %24 : vector<256x128xf32> to vector<256x128xbf16>
    %c0_18 = arith.constant 0 : index
    %c0_19 = arith.constant 0 : index
    %26 = vector.load %arg8[%c0_18, %c0_19] : memref<128x64xbf16, #tpu.memory_space<vmem>>, vector<128x64xbf16>
    %cst_20 = arith.constant dense<0.000000e+00> : vector<256x64xf32>
    %27 = tpu.matmul %25, %26, %cst_20 {dimension_numbers = #tpu.dot_dimension_numbers<[1], [0], [0], [1], [0, 0, 1, 1], [], []>} : vector<256x128xbf16>, vector<128x64xbf16>, vector<256x64xf32> -> vector<256x64xf32>
    %c0_21 = arith.constant 0 : index
    %c0_22 = arith.constant 0 : index
    %28 = vector.load %arg9[%c0_21, %c0_22] : memref<1x64xf32, #tpu.memory_space<vmem>>, vector<1x64xf32>
    %29 = vector.broadcast %28 : vector<1x64xf32> to vector<256x64xf32>
    %30 = arith.addf %27, %29 : vector<256x64xf32>
    %c0_23 = arith.constant 0 : index
    %c0_24 = arith.constant 0 : index
    %31 = vector.load %arg10[%c0_23, %c0_24] : memref<256x64xf32, #tpu.memory_space<vmem>>, vector<256x64xf32>
    tpu.vector_store %arg10[%c0_23, %c0_24], %30 {strides = array<i32>} : memref<256x64xf32, #tpu.memory_space<vmem>>, vector<256x64xf32>,
    return
  }
  func.func @transform_0(%arg0: i32) -> (i32, i32) {
    %c0_i32 = arith.constant 0 : i32
    %c0_i32_0 = arith.constant 0 : i32
    return %arg0, %c0_i32 : i32, i32
  }
  func.func @transform_1(%arg0: i32) -> (i32, i32) {
    %c0_i32 = arith.constant 0 : i32
    %c0_i32_0 = arith.constant 0 : i32
    %c0_i32_1 = arith.constant 0 : i32
    return %c0_i32, %c0_i32_0 : i32, i32
  }
  func.func @transform_2(%arg0: i32) -> (i32, i32) {
    %c0_i32 = arith.constant 0 : i32
    %c0_i32_0 = arith.constant 0 : i32
    %c0_i32_1 = arith.constant 0 : i32
    return %c0_i32, %c0_i32_0 : i32, i32
  }
  func.func @transform_3(%arg0: i32) -> (i32, i32) {
    %c0_i32 = arith.constant 0 : i32
    %c0_i32_0 = arith.constant 0 : i32
    %c0_i32_1 = arith.constant 0 : i32
    return %c0_i32, %c0_i32_0 : i32, i32
  }
  func.func @transform_4(%arg0: i32) -> (i32, i32) {
    %c0_i32 = arith.constant 0 : i32
    %c0_i32_0 = arith.constant 0 : i32
    %c0_i32_1 = arith.constant 0 : i32
    return %c0_i32, %c0_i32_0 : i32, i32
  }
  func.func @transform_5(%arg0: i32) -> (i32, i32) {
    %c0_i32 = arith.constant 0 : i32
    %c0_i32_0 = arith.constant 0 : i32
    %c0_i32_1 = arith.constant 0 : i32
    return %c0_i32, %c0_i32_0 : i32, i32
  }
  func.func @transform_6(%arg0: i32) -> (i32, i32) {
    %c0_i32 = arith.constant 0 : i32
    %c0_i32_0 = arith.constant 0 : i32
    %c0_i32_1 = arith.constant 0 : i32
    return %c0_i32, %c0_i32_0 : i32, i32
  }
  func.func @transform_7(%arg0: i32) -> (i32, i32) {
    %c0_i32 = arith.constant 0 : i32
    %c0_i32_0 = arith.constant 0 : i32
    %c0_i32_1 = arith.constant 0 : i32
    return %c0_i32, %c0_i32_0 : i32, i32
  }
  func.func @transform_8(%arg0: i32) -> (i32, i32) {
    %c0_i32 = arith.constant 0 : i32
    %c0_i32_0 = arith.constant 0 : i32
    %c0_i32_1 = arith.constant 0 : i32
    return %c0_i32, %c0_i32_0 : i32, i32
  }
  func.func @transform_9(%arg0: i32) -> (i32, i32) {
    %c0_i32 = arith.constant 0 : i32
    %c0_i32_0 = arith.constant 0 : i32
    return %arg0, %c0_i32 : i32, i32
  }
}

module attributes {stable_mosaic.version = 11 : i64} {
  func.func @_autoencoder_kernel(%arg0: i32, %arg1: memref<256x64xf32, #tpu.memory_space<vmem>>, %arg2: memref<64x128xbf16, #tpu.memory_space<vmem>>, %arg3: memref<1x128xf32, #tpu.memory_space<vmem>>, %arg4: memref<128x128xbf16, #tpu.memory_space<vmem>>, %arg5: memref<1x128xf32, #tpu.memory_space<vmem>>, %arg6: memref<128x128xbf16, #tpu.memory_space<vmem>>, %arg7: memref<1x128xf32, #tpu.memory_space<vmem>>, %arg8: memref<128x64xbf16, #tpu.memory_space<vmem>>, %arg9: memref<1x64xf32, #tpu.memory_space<vmem>>, %arg10: memref<256x64xf32, #tpu.memory_space<vmem>>) attributes {dimension_semantics = [#tpu.dimension_semantics<parallel>], iteration_bounds = array<i64: 1>, scalar_prefetch = 0 : i64, scratch_operands = 0 : i64, tpu.core_type = #tpu.core_type<tc>, window_params = [{transform_indices = @transform_0, window_bounds = array<i64: 256, 64>}, {pipeline_mode = #tpu.pipeline_mode<synchronous>, transform_indices = @transform_1, window_bounds = array<i64: 64, 128>}, {pipeline_mode = #tpu.pipeline_mode<synchronous>, transform_indices = @transform_2, window_bounds = array<i64: 1, 128>}, {pipeline_mode = #tpu.pipeline_mode<synchronous>, transform_indices = @transform_3, window_bounds = array<i64: 128, 128>}, {pipeline_mode = #tpu.pipeline_mode<synchronous>, transform_indices = @transform_4, window_bounds = array<i64: 1, 128>}, {pipeline_mode = #tpu.pipeline_mode<synchronous>, transform_indices = @transform_5, window_bounds = array<i64: 128, 128>}, {pipeline_mode = #tpu.pipeline_mode<synchronous>, transform_indices = @transform_6, window_bounds = array<i64: 1, 128>}, {pipeline_mode = #tpu.pipeline_mode<synchronous>, transform_indices = @transform_7, window_bounds = array<i64: 128, 64>}, {pipeline_mode = #tpu.pipeline_mode<synchronous>, transform_indices = @transform_8, window_bounds = array<i64: 1, 64>}, {transform_indices = @transform_9, window_bounds = array<i64: 256, 64>}]} {
    %c0 = arith.constant 0 : index
    %c0_0 = arith.constant 0 : index
    %0 = vector.load %arg1[%c0, %c0_0] : memref<256x64xf32, #tpu.memory_space<vmem>>, vector<256x64xf32>
    %1 = arith.truncf %0 : vector<256x64xf32> to vector<256x64xbf16>
    %c0_1 = arith.constant 0 : index
    %c0_2 = arith.constant 0 : index
    %2 = vector.load %arg2[%c0_1, %c0_2] : memref<64x128xbf16, #tpu.memory_space<vmem>>, vector<64x128xbf16>
    %cst = arith.constant dense<0.000000e+00> : vector<256x128xf32>
    %3 = tpu.matmul %1, %2, %cst {dimension_numbers = #tpu.dot_dimension_numbers<[1], [0], [0], [1], [0, 0, 1, 1], [], []>} : vector<256x64xbf16>, vector<64x128xbf16>, vector<256x128xf32> -> vector<256x128xf32>
    %c0_3 = arith.constant 0 : index
    %c0_4 = arith.constant 0 : index
    %4 = vector.load %arg3[%c0_3, %c0_4] : memref<1x128xf32, #tpu.memory_space<vmem>>, vector<1x128xf32>
    %5 = vector.broadcast %4 : vector<1x128xf32> to vector<256x128xf32>
    %6 = arith.addf %3, %5 : vector<256x128xf32>
    %cst_5 = arith.constant 0.000000e+00 : f32
    %7 = vector.broadcast %cst_5 : f32 to vector<256x128xf32>
    %8 = arith.maximumf %6, %7 : vector<256x128xf32>
    %9 = arith.truncf %8 : vector<256x128xf32> to vector<256x128xbf16>
    %c0_6 = arith.constant 0 : index
    %c0_7 = arith.constant 0 : index
    %10 = vector.load %arg4[%c0_6, %c0_7] : memref<128x128xbf16, #tpu.memory_space<vmem>>, vector<128x128xbf16>
    %cst_8 = arith.constant dense<0.000000e+00> : vector<256x128xf32>
    %11 = tpu.matmul %9, %10, %cst_8 {dimension_numbers = #tpu.dot_dimension_numbers<[1], [0], [0], [1], [0, 0, 1, 1], [], []>} : vector<256x128xbf16>, vector<128x128xbf16>, vector<256x128xf32> -> vector<256x128xf32>
    %c0_9 = arith.constant 0 : index
    %c0_10 = arith.constant 0 : index
    %12 = vector.load %arg5[%c0_9, %c0_10] : memref<1x128xf32, #tpu.memory_space<vmem>>, vector<1x128xf32>
    %13 = vector.broadcast %12 : vector<1x128xf32> to vector<256x128xf32>
    %14 = arith.addf %11, %13 : vector<256x128xf32>
    %cst_11 = arith.constant 0.000000e+00 : f32
    %15 = vector.broadcast %cst_11 : f32 to vector<256x128xf32>
    %16 = arith.maximumf %14, %15 : vector<256x128xf32>
    %17 = arith.truncf %16 : vector<256x128xf32> to vector<256x128xbf16>
    %c0_12 = arith.constant 0 : index
    %c0_13 = arith.constant 0 : index
    %18 = vector.load %arg6[%c0_12, %c0_13] : memref<128x128xbf16, #tpu.memory_space<vmem>>, vector<128x128xbf16>
    %cst_14 = arith.constant dense<0.000000e+00> : vector<256x128xf32>
    %19 = tpu.matmul %17, %18, %cst_14 {dimension_numbers = #tpu.dot_dimension_numbers<[1], [0], [0], [1], [0, 0, 1, 1], [], []>} : vector<256x128xbf16>, vector<128x128xbf16>, vector<256x128xf32> -> vector<256x128xf32>
    %c0_15 = arith.constant 0 : index
    %c0_16 = arith.constant 0 : index
    %20 = vector.load %arg7[%c0_15, %c0_16] : memref<1x128xf32, #tpu.memory_space<vmem>>, vector<1x128xf32>
    %21 = vector.broadcast %20 : vector<1x128xf32> to vector<256x128xf32>
    %22 = arith.addf %19, %21 : vector<256x128xf32>
    %cst_17 = arith.constant 0.000000e+00 : f32
    %23 = vector.broadcast %cst_17 : f32 to vector<256x128xf32>
    %24 = arith.maximumf %22, %23 : vector<256x128xf32>
    %25 = arith.truncf %24 : vector<256x128xf32> to vector<256x128xbf16>
    %c0_18 = arith.constant 0 : index
    %c0_19 = arith.constant 0 : index
    %26 = vector.load %arg8[%c0_18, %c0_19] : memref<128x64xbf16, #tpu.memory_space<vmem>>, vector<128x64xbf16>
    %cst_20 = arith.constant dense<0.000000e+00> : vector<256x64xf32>
    %27 = tpu.matmul %25, %26, %cst_20 {dimension_numbers = #tpu.dot_dimension_numbers<[1], [0], [0], [1], [0, 0, 1, 1], [], []>} : vector<256x128xbf16>, vector<128x64xbf16>, vector<256x64xf32> -> vector<256x64xf32>
    %c0_21 = arith.constant 0 : index
    %c0_22 = arith.constant 0 : index
    %28 = vector.load %arg9[%c0_21, %c0_22] : memref<1x64xf32, #tpu.memory_space<vmem>>, vector<1x64xf32>
    %29 = vector.broadcast %28 : vector<1x64xf32> to vector<256x64xf32>
    %30 = arith.addf %27, %29 : vector<256x64xf32>
    %c0_23 = arith.constant 0 : index
    %c0_24 = arith.constant 0 : index
    %31 = vector.load %arg10[%c0_23, %c0_24] : memref<256x64xf32, #tpu.memory_space<vmem>>, vector<256x64xf32>
    tpu.vector_store %arg10[%c0_23, %c0_24], %30 {strides = array<i32>} : memref<256x64xf32, #tpu.memory_space<vmem>>, vector<256x64xf32>,
    return
  }
  func.func @transform_0(%arg0: i32) -> (i32, i32) {
    %c0_i32 = arith.constant 0 : i32
    %c0_i32_0 = arith.constant 0 : i32
    return %arg0, %c0_i32 : i32, i32
  }
  func.func @transform_1(%arg0: i32) -> (i32, i32) {
    %c0_i32 = arith.constant 0 : i32
    %c0_i32_0 = arith.constant 0 : i32
    %c0_i32_1 = arith.constant 0 : i32
    return %c0_i32, %c0_i32_0 : i32, i32
  }
  func.func @transform_2(%arg0: i32) -> (i32, i32) {
    %c0_i32 = arith.constant 0 : i32
    %c0_i32_0 = arith.constant 0 : i32
    %c0_i32_1 = arith.constant 0 : i32
    return %c0_i32, %c0_i32_0 : i32, i32
  }
  func.func @transform_3(%arg0: i32) -> (i32, i32) {
    %c0_i32 = arith.constant 0 : i32
    %c0_i32_0 = arith.constant 0 : i32
    %c0_i32_1 = arith.constant 0 : i32
    return %c0_i32, %c0_i32_0 : i32, i32
  }
  func.func @transform_4(%arg0: i32) -> (i32, i32) {
    %c0_i32 = arith.constant 0 : i32
    %c0_i32_0 = arith.constant 0 : i32
    %c0_i32_1 = arith.constant 0 : i32
    return %c0_i32, %c0_i32_0 : i32, i32
  }
  func.func @transform_5(%arg0: i32) -> (i32, i32) {
    %c0_i32 = arith.constant 0 : i32
    %c0_i32_0 = arith.constant 0 : i32
    %c0_i32_1 = arith.constant 0 : i32
    return %c0_i32, %c0_i32_0 : i32, i32
  }
  func.func @transform_6(%arg0: i32) -> (i32, i32) {
    %c0_i32 = arith.constant 0 : i32
    %c0_i32_0 = arith.constant 0 : i32
    %c0_i32_1 = arith.constant 0 : i32
    return %c0_i32, %c0_i32_0 : i32, i32
  }
  func.func @transform_7(%arg0: i32) -> (i32, i32) {
    %c0_i32 = arith.constant 0 : i32
    %c0_i32_0 = arith.constant 0 : i32
    %c0_i32_1 = arith.constant 0 : i32
    return %c0_i32, %c0_i32_0 : i32, i32
  }
  func.func @transform_8(%arg0: i32) -> (i32, i32) {
    %c0_i32 = arith.constant 0 : i32
    %c0_i32_0 = arith.constant 0 : i32
    %c0_i32_1 = arith.constant 0 : i32
    return %c0_i32, %c0_i32_0 : i32, i32
  }
  func.func @transform_9(%arg0: i32) -> (i32, i32) {
    %c0_i32 = arith.constant 0 : i32
    %c0_i32_0 = arith.constant 0 : i32
    return %arg0, %c0_i32 : i32, i32
  }
}

</mosaic_0001>

<llo_original>
// kernel: autoencoder_forward.1
$region0: #{autoencoder_forward.1}
  #allocation0 [shape = 'u32[]', space=smem, size = 0x4, offset = 0x4, fixed_abs, tag = 'smem constant byte address 0x4 - core index']
  #allocation1 [shape = 'u32[144,128]{1,0:T(1,128)}', space=vmem, size = 0x12000, scoped, tag = 'internal scratch']
  %s0 = inlined_call_operand.vmem [shape: f32[256,64], index: 0, kind: input, shape index: {}]
  %s1 = inlined_call_operand.vmem [shape: bf16[64,128], index: 1, kind: input, shape index: {}]
  %s2 = inlined_call_operand.vmem [shape: f32[1,128], index: 2, kind: input, shape index: {}]
  %s3 = inlined_call_operand.vmem [shape: bf16[128,128], index: 3, kind: input, shape index: {}]
  %s4 = inlined_call_operand.vmem [shape: f32[1,128], index: 4, kind: input, shape index: {}]
  %s5 = inlined_call_operand.vmem [shape: bf16[128,128], index: 5, kind: input, shape index: {}]
  %s6 = inlined_call_operand.vmem [shape: f32[1,128], index: 6, kind: input, shape index: {}]
  %s7 = inlined_call_operand.vmem [shape: bf16[128,64], index: 7, kind: input, shape index: {}]
  %s8 = inlined_call_operand.vmem [shape: f32[1,64], index: 8, kind: input, shape index: {}]
  %s9 = inlined_call_operand.vmem [shape: f32[256,64], index: 9, kind: output, shape index: {}]
  %s10 = sld [smem:[#allocation0]]
  $region46: #{autoencoder_forward.1} parent=0
    _
  %s12 = ssub.s32 1, %s10
  %s13 = scalar_select 0, %s12, %s10
  // Predicated region
  $region2: #{autoencoder_forward.1} parent=0 // pred_check
    _
  $region3: #{autoencoder_forward.1} parent=0 // pred_check_branch
    %15 = sbr.rel (0) target = $region5
  $region4: #{autoencoder_forward.1} parent=0 // pred_region
    _
  $region5: #{autoencoder_forward.1} parent=0 // pred_fallthru
    _
  // Predicated region
  $region6: #{autoencoder_forward.1} parent=0 // pred_check
    _
  $region7: #{autoencoder_forward.1} parent=0 // pred_check_branch
    %17 = sbr.rel (0) target = $region9
  $region8: #{autoencoder_forward.1} parent=0 // pred_region
    _
  $region9: #{autoencoder_forward.1} parent=0 // pred_fallthru
    _
  // Predicated region
  $region10: #{autoencoder_forward.1} parent=0 // pred_check
    _
  $region11: #{autoencoder_forward.1} parent=0 // pred_check_branch
    %19 = sbr.rel (0) target = $region13
  $region12: #{autoencoder_forward.1} parent=0 // pred_region
    _
  $region13: #{autoencoder_forward.1} parent=0 // pred_fallthru
    _
  // Predicated region
  $region14: #{autoencoder_forward.1} parent=0 // pred_check
    _
  $region15: #{autoencoder_forward.1} parent=0 // pred_check_branch
    %21 = sbr.rel (0) target = $region17
  $region16: #{autoencoder_forward.1} parent=0 // pred_region
    _
  $region17: #{autoencoder_forward.1} parent=0 // pred_fallthru
    _
  // Predicated region
  $region18: #{autoencoder_forward.1} parent=0 // pred_check
    _
  $region19: #{autoencoder_forward.1} parent=0 // pred_check_branch
    %23 = sbr.rel (0) target = $region21
  $region20: #{autoencoder_forward.1} parent=0 // pred_region
    _
  $region21: #{autoencoder_forward.1} parent=0 // pred_fallthru
    _
  // Predicated region
  $region22: #{autoencoder_forward.1} parent=0 // pred_check
    _
  $region23: #{autoencoder_forward.1} parent=0 // pred_check_branch
    %25 = sbr.rel (0) target = $region25
  $region24: #{autoencoder_forward.1} parent=0 // pred_region
    _
  $region25: #{autoencoder_forward.1} parent=0 // pred_fallthru
    _
  // Predicated region
  $region26: #{autoencoder_forward.1} parent=0 // pred_check
    _
  $region27: #{autoencoder_forward.1} parent=0 // pred_check_branch
    %27 = sbr.rel (0) target = $region29
  $region28: #{autoencoder_forward.1} parent=0 // pred_region
    _
  $region29: #{autoencoder_forward.1} parent=0 // pred_fallthru
    _
  // Predicated region
  $region30: #{autoencoder_forward.1} parent=0 // pred_check
    _
  $region31: #{autoencoder_forward.1} parent=0 // pred_check_branch
    %29 = sbr.rel (0) target = $region33
  $region32: #{autoencoder_forward.1} parent=0 // pred_region
    _
  $region33: #{autoencoder_forward.1} parent=0 // pred_fallthru
    _
  // Predicated region
  $region34: #{autoencoder_forward.1} parent=0 // pred_check
    _
  $region35: #{autoencoder_forward.1} parent=0 // pred_check_branch
    %31 = sbr.rel (0) target = $region37
  $region36: #{autoencoder_forward.1} parent=0 // pred_region
    _
  $region37: #{autoencoder_forward.1} parent=0 // pred_fallthru
    _
  %v33 = vld [vmem:[%s0] sm:$0xff]
  %v34 = vld [vmem:[%s0 + $0x8] sm:$0xff]
  %v35 = vld [vmem:[%s0 + $0x10] sm:$0xff]
  %v36 = vld [vmem:[%s0 + $0x18] sm:$0xff]
  %v37 = vld [vmem:[%s0 + $0x20] sm:$0xff]
  %v38 = vld [vmem:[%s0 + $0x28] sm:$0xff]
  %v39 = vld [vmem:[%s0 + $0x30] sm:$0xff]
  %v40 = vld [vmem:[%s0 + $0x38] sm:$0xff]
  %v41 = vld [vmem:[%s0 + $0x40] sm:$0xff]
  %v42 = vld [vmem:[%s0 + $0x48] sm:$0xff]
  %v43 = vld [vmem:[%s0 + $0x50] sm:$0xff]
  %v44 = vld [vmem:[%s0 + $0x58] sm:$0xff]
  %v45 = vld [vmem:[%s0 + $0x60] sm:$0xff]
  %v46 = vld [vmem:[%s0 + $0x68] sm:$0xff]
  %v47 = vld [vmem:[%s0 + $0x70] sm:$0xff]
  %v48 = vld [vmem:[%s0 + $0x78] sm:$0xff]
  %v49 = vld [vmem:[%s0 + $0x80] sm:$0xff]
  %v50 = vld [vmem:[%s0 + $0x88] sm:$0xff]
  %v51 = vld [vmem:[%s0 + $0x90] sm:$0xff]
  %v52 = vld [vmem:[%s0 + $0x98] sm:$0xff]
  %v53 = vld [vmem:[%s0 + $0xa0] sm:$0xff]
  %v54 = vld [vmem:[%s0 + $0xa8] sm:$0xff]
  %v55 = vld [vmem:[%s0 + $0xb0] sm:$0xff]
  %v56 = vld [vmem:[%s0 + $0xb8] sm:$0xff]
  %v57 = vld [vmem:[%s0 + $0xc0] sm:$0xff]
  %v58 = vld [vmem:[%s0 + $0xc8] sm:$0xff]
  %v59 = vld [vmem:[%s0 + $0xd0] sm:$0xff]
  %v60 = vld [vmem:[%s0 + $0xd8] sm:$0xff]
  %v61 = vld [vmem:[%s0 + $0xe0] sm:$0xff]
  %v62 = vld [vmem:[%s0 + $0xe8] sm:$0xff]
  %v63 = vld [vmem:[%s0 + $0xf0] sm:$0xff]
  %v64 = vld [vmem:[%s0 + $0xf8] sm:$0xff]
  %v65 = vpack.c.bf16 %v34, %v33
  %v66 = vpack.c.bf16 %v36, %v35
  %v67 = vpack.c.bf16 %v38, %v37
  %v68 = vpack.c.bf16 %v40, %v39
  %v69 = vpack.c.bf16 %v42, %v41
  %v70 = vpack.c.bf16 %v44, %v43
  %v71 = vpack.c.bf16 %v46, %v45
  %v72 = vpack.c.bf16 %v48, %v47
  %v73 = vpack.c.bf16 %v50, %v49
  %v74 = vpack.c.bf16 %v52, %v51
  %v75 = vpack.c.bf16 %v54, %v53
  %v76 = vpack.c.bf16 %v56, %v55
  %v77 = vpack.c.bf16 %v58, %v57
  %v78 = vpack.c.bf16 %v60, %v59
  %v79 = vpack.c.bf16 %v62, %v61
  %v80 = vpack.c.bf16 %v64, %v63
  %v81 = vld [vmem:[%s1] sm:$0xf]
  %v82 = vld [vmem:[%s1 + $0x4] sm:$0xf]
  %v83 = vld [vmem:[%s1 + $0x8] sm:$0xf]
  %v84 = vld [vmem:[%s1 + $0xc] sm:$0xf]
  %v85 = vld [vmem:[%s1 + $0x10] sm:$0xf]
  %v86 = vld [vmem:[%s1 + $0x14] sm:$0xf]
  %v87 = vld [vmem:[%s1 + $0x18] sm:$0xf]
  %v88 = vld [vmem:[%s1 + $0x1c] sm:$0xf]
  %v89 = vld [vmem:[%s2] sm:$0x1]
  %v91 = vlaneseq
  %v92 = vshrl.u32 %v91, 7
  %v93 = vsub.s32 0, %v92
  %v94 = vrot.slane %v89, %v93
  %v104 = vunpack.c.l.b16 %v81
  %v105 = vunpack.c.l.b16 %v82
  %v106 = vunpack.c.l.b16 %v83
  %v107 = vunpack.c.l.b16 %v84
  %v108 = vunpack.c.l.b16 %v85
  %v109 = vunpack.c.l.b16 %v86
  %v110 = vunpack.c.l.b16 %v87
  %v111 = vunpack.c.l.b16 %v88
  %v112 = vpack.c.b16 %v105, %v104
  %v113 = vpack.c.b16 %v107, %v106
  %v114 = vpack.c.b16 %v109, %v108
  %v115 = vpack.c.b16 %v111, %v110
  %vm120 = vcmask 523264
  %v122 = vsel %vm120, %v65, 0
  %v125 = vsel %vm120, %v66, 0
  %v128 = vsel %vm120, %v67, 0
  %v131 = vsel %vm120, %v68, 0
  %v134 = vsel %vm120, %v69, 0
  %v137 = vsel %vm120, %v70, 0
  %v140 = vsel %vm120, %v71, 0
  %v143 = vsel %vm120, %v72, 0
  %v146 = vsel %vm120, %v73, 0
  %v149 = vsel %vm120, %v74, 0
  %v152 = vsel %vm120, %v75, 0
  %v155 = vsel %vm120, %v76, 0
  %v158 = vsel %vm120, %v77, 0
  %v161 = vsel %vm120, %v78, 0
  %v164 = vsel %vm120, %v79, 0
  %v167 = vsel %vm120, %v80, 0
  %169 = vmatprep.subr.bf16.mxu0 0
  %170 = vmatpush1.bf16.msra.mxu0 0
  %171 = vmatprep.subr.bf16.mxu0 0
  %172 = vmatpush1.bf16.msra.mxu0 0
  %173 = vmatprep.subr.bf16.mxu0 0
  %174 = vmatpush1.bf16.msra.mxu0 0
  %175 = vmatprep.subr.bf16.mxu0 0
  %176 = vmatpush1.bf16.msra.mxu0 0
  %177 = vmatprep.subr.bf16.mxu0 0
  %178 = vmatpush1.bf16.msra.mxu0 %v115
  %179 = vmatprep.subr.bf16.mxu0 0
  %180 = vmatpush1.bf16.msra.mxu0 %v114
  %181 = vmatprep.subr.bf16.mxu0 0
  %182 = vmatpush1.bf16.msra.mxu0 %v113
  %183 = vmatprep.subr.bf16.mxu0 0
  %184 = vmatpush1.bf16.msra.mxu0 %v112
  %185 = vmatprep.subr.bf16.mxu0 0
  %186 = vmatpush2.bf16.msra.mxu0 0
  %187 = vmatprep.subr.bf16.mxu0 0
  %188 = vmatpush2.bf16.msra.mxu0 0
  %189 = vmatprep.subr.bf16.mxu0 0
  %190 = vmatpush2.bf16.msra.mxu0 0
  %191 = vmatprep.subr.bf16.mxu0 0
  %192 = vmatpush2.bf16.msra.mxu0 0
  %193 = vmatprep.subr.bf16.mxu0 0
  %194 = vmatpush2.bf16.msra.mxu0 0
  %195 = vmatprep.subr.bf16.mxu0 0
  %196 = vmatpush2.bf16.msra.mxu0 0
  %197 = vmatprep.subr.bf16.mxu0 0
  %198 = vmatpush2.bf16.msra.mxu0 0
  %199 = vmatprep.subr.bf16.mxu0 0
  %200 = vmatpush2.bf16.msra.mxu0 0
  %201 = vmatprep.mubr.bf16.mxu0 0
  %202 = vmatmul.mubr.bf16.gmra.mxu0 %v122
  %v203 = vpop.f32.mrf.mxu0
  %v204 = vadd.f32 %v94, %v203
  %v205 = vpop.f32.mrf.mxu0
  %v206 = vpop.f32.mrf.mxu0
  %v207 = vadd.f32 %v94, %v206
  %v208 = vpop.f32.mrf.mxu0
  %209 = vmatprep.mubr.bf16.mxu0 0
  %210 = vmatmul.mubr.bf16.gmra.mxu0 %v125
  %v211 = vpop.f32.mrf.mxu0
  %v212 = vadd.f32 %v94, %v211
  %v213 = vpop.f32.mrf.mxu0
  %v214 = vpop.f32.mrf.mxu0
  %v215 = vadd.f32 %v94, %v214
  %v216 = vpop.f32.mrf.mxu0
  %217 = vmatprep.mubr.bf16.mxu0 0
  %218 = vmatmul.mubr.bf16.gmra.mxu0 %v128
  %v219 = vpop.f32.mrf.mxu0
  %v220 = vadd.f32 %v94, %v219
  %v221 = vpop.f32.mrf.mxu0
  %v222 = vpop.f32.mrf.mxu0
  %v223 = vadd.f32 %v94, %v222
  %v224 = vpop.f32.mrf.mxu0
  %225 = vmatprep.mubr.bf16.mxu0 0
  %226 = vmatmul.mubr.bf16.gmra.mxu0 %v131
  %v227 = vpop.f32.mrf.mxu0
  %v228 = vadd.f32 %v94, %v227
  %v229 = vpop.f32.mrf.mxu0
  %v230 = vpop.f32.mrf.mxu0
  %v231 = vadd.f32 %v94, %v230
  %v232 = vpop.f32.mrf.mxu0
  %233 = vmatprep.mubr.bf16.mxu0 0
  %234 = vmatmul.mubr.bf16.gmra.mxu0 %v134
  %v235 = vpop.f32.mrf.mxu0
  %v236 = vadd.f32 %v94, %v235
  %v237 = vpop.f32.mrf.mxu0
  %v238 = vpop.f32.mrf.mxu0
  %v239 = vadd.f32 %v94, %v238
  %v240 = vpop.f32.mrf.mxu0
  %241 = vmatprep.mubr.bf16.mxu0 0
  %242 = vmatmul.mubr.bf16.gmra.mxu0 %v137
  %v243 = vpop.f32.mrf.mxu0
  %v244 = vadd.f32 %v94, %v243
  %v245 = vpop.f32.mrf.mxu0
  %v246 = vpop.f32.mrf.mxu0
  %v247 = vadd.f32 %v94, %v246
  %v248 = vpop.f32.mrf.mxu0
  %249 = vmatprep.mubr.bf16.mxu0 0
  %250 = vmatmul.mubr.bf16.gmra.mxu0 %v140
  %v251 = vpop.f32.mrf.mxu0
  %v252 = vadd.f32 %v94, %v251
  %v253 = vpop.f32.mrf.mxu0
  %v254 = vpop.f32.mrf.mxu0
  %v255 = vadd.f32 %v94, %v254
  %v256 = vpop.f32.mrf.mxu0
  %257 = vmatprep.mubr.bf16.mxu0 0
  %258 = vmatmul.mubr.bf16.gmra.mxu0 %v143
  %v259 = vpop.f32.mrf.mxu0
  %v260 = vadd.f32 %v94, %v259
  %v261 = vpop.f32.mrf.mxu0
  %v262 = vpop.f32.mrf.mxu0
  %v263 = vadd.f32 %v94, %v262
  %v264 = vpop.f32.mrf.mxu0
  %265 = vmatprep.mubr.bf16.mxu0 0
  %266 = vmatmul.mubr.bf16.gmra.mxu0 %v146
  %v267 = vpop.f32.mrf.mxu0
  %v268 = vadd.f32 %v94, %v267
  %v269 = vpop.f32.mrf.mxu0
  %v270 = vpop.f32.mrf.mxu0
  %v271 = vadd.f32 %v94, %v270
  %v272 = vpop.f32.mrf.mxu0
  %273 = vmatprep.mubr.bf16.mxu0 0
  %274 = vmatmul.mubr.bf16.gmra.mxu0 %v149
  %v275 = vpop.f32.mrf.mxu0
  %v276 = vadd.f32 %v94, %v275
  %v277 = vpop.f32.mrf.mxu0
  %v278 = vpop.f32.mrf.mxu0
  %v279 = vadd.f32 %v94, %v278
  %v280 = vpop.f32.mrf.mxu0
  %281 = vmatprep.mubr.bf16.mxu0 0
  %282 = vmatmul.mubr.bf16.gmra.mxu0 %v152
  %v283 = vpop.f32.mrf.mxu0
  %v284 = vadd.f32 %v94, %v283
  %v285 = vpop.f32.mrf.mxu0
  %v286 = vpop.f32.mrf.mxu0
  %v287 = vadd.f32 %v94, %v286
  %v288 = vpop.f32.mrf.mxu0
  %289 = vmatprep.mubr.bf16.mxu0 0
  %290 = vmatmul.mubr.bf16.gmra.mxu0 %v155
  %v291 = vpop.f32.mrf.mxu0
  %v292 = vadd.f32 %v94, %v291
  %v293 = vpop.f32.mrf.mxu0
  %v294 = vpop.f32.mrf.mxu0
  %v295 = vadd.f32 %v94, %v294
  %v296 = vpop.f32.mrf.mxu0
  %297 = vmatprep.mubr.bf16.mxu0 0
  %298 = vmatmul.mubr.bf16.gmra.mxu0 %v158
  %v299 = vpop.f32.mrf.mxu0
  %v300 = vadd.f32 %v94, %v299
  %v301 = vpop.f32.mrf.mxu0
  %v302 = vpop.f32.mrf.mxu0
  %v303 = vadd.f32 %v94, %v302
  %v304 = vpop.f32.mrf.mxu0
  %305 = vmatprep.mubr.bf16.mxu0 0
  %306 = vmatmul.mubr.bf16.gmra.mxu0 %v161
  %v307 = vpop.f32.mrf.mxu0
  %v308 = vadd.f32 %v94, %v307
  %v309 = vpop.f32.mrf.mxu0
  %v310 = vpop.f32.mrf.mxu0
  %v311 = vadd.f32 %v94, %v310
  %v312 = vpop.f32.mrf.mxu0
  %313 = vmatprep.mubr.bf16.mxu0 0
  %314 = vmatmul.mubr.bf16.gmra.mxu0 %v164
  %v315 = vpop.f32.mrf.mxu0
  %v316 = vadd.f32 %v94, %v315
  %v317 = vpop.f32.mrf.mxu0
  %v318 = vpop.f32.mrf.mxu0
  %v319 = vadd.f32 %v94, %v318
  %v320 = vpop.f32.mrf.mxu0
  %321 = vmatprep.mubr.bf16.mxu0 0
  %322 = vmatmul.mubr.bf16.gmra.mxu0 %v167
  %v323 = vpop.f32.mrf.mxu0
  %v324 = vadd.f32 %v94, %v323
  %v325 = vpop.f32.mrf.mxu0
  %v326 = vpop.f32.mrf.mxu0
  %v327 = vadd.f32 %v94, %v326
  %v328 = vpop.f32.mrf.mxu0
  %329 = vdwg.mxu0
  %v330 = vmax.f32 %v204, 0.0
  %v331 = vmax.f32 %v207, 0.0
  %v332 = vmax.f32 %v212, 0.0
  %v333 = vmax.f32 %v215, 0.0
  %v334 = vmax.f32 %v220, 0.0
  %v335 = vmax.f32 %v223, 0.0
  %v336 = vmax.f32 %v228, 0.0
  %v337 = vmax.f32 %v231, 0.0
  %v338 = vmax.f32 %v236, 0.0
  %v339 = vmax.f32 %v239, 0.0
  %v340 = vmax.f32 %v244, 0.0
  %v341 = vmax.f32 %v247, 0.0
  %v342 = vmax.f32 %v252, 0.0
  %v343 = vmax.f32 %v255, 0.0
  %v344 = vmax.f32 %v260, 0.0
  %v345 = vmax.f32 %v263, 0.0
  %v346 = vmax.f32 %v268, 0.0
  %v347 = vmax.f32 %v271, 0.0
  %v348 = vmax.f32 %v276, 0.0
  %v349 = vmax.f32 %v279, 0.0
  %v350 = vmax.f32 %v284, 0.0
  %v351 = vmax.f32 %v287, 0.0
  %v352 = vmax.f32 %v292, 0.0
  %v353 = vmax.f32 %v295, 0.0
  %v354 = vmax.f32 %v300, 0.0
  %v355 = vmax.f32 %v303, 0.0
  %v356 = vmax.f32 %v308, 0.0
  %v357 = vmax.f32 %v311, 0.0
  %v358 = vmax.f32 %v316, 0.0
  %v359 = vmax.f32 %v319, 0.0
  %v360 = vmax.f32 %v324, 0.0
  %v361 = vmax.f32 %v327, 0.0
  %v362 = vpack.c.bf16 %v331, %v330
  %v363 = vpack.c.bf16 %v333, %v332
  %v364 = vpack.c.bf16 %v335, %v334
  %v365 = vpack.c.bf16 %v337, %v336
  %v366 = vpack.c.bf16 %v339, %v338
  %v367 = vpack.c.bf16 %v341, %v340
  %v368 = vpack.c.bf16 %v343, %v342
  %v369 = vpack.c.bf16 %v345, %v344
  %v370 = vpack.c.bf16 %v347, %v346
  %v371 = vpack.c.bf16 %v349, %v348
  %v372 = vpack.c.bf16 %v351, %v350
  %v373 = vpack.c.bf16 %v353, %v352
  %v374 = vpack.c.bf16 %v355, %v354
  %v375 = vpack.c.bf16 %v357, %v356
  %v376 = vpack.c.bf16 %v359, %v358
  %v377 = vpack.c.bf16 %v361, %v360
  %v378 = vld [vmem:[%s3] sm:$0xf]
  %v379 = vld [vmem:[%s3 + $0x4] sm:$0xf]
  %v380 = vld [vmem:[%s3 + $0x8] sm:$0xf]
  %v381 = vld [vmem:[%s3 + $0xc] sm:$0xf]
  %v382 = vld [vmem:[%s3 + $0x10] sm:$0xf]
  %v383 = vld [vmem:[%s3 + $0x14] sm:$0xf]
  %v384 = vld [vmem:[%s3 + $0x18] sm:$0xf]
  %v385 = vld [vmem:[%s3 + $0x1c] sm:$0xf]
  %v386 = vld [vmem:[%s3 + $0x20] sm:$0xf]
  %v387 = vld [vmem:[%s3 + $0x24] sm:$0xf]
  %v388 = vld [vmem:[%s3 + $0x28] sm:$0xf]
  %v389 = vld [vmem:[%s3 + $0x2c] sm:$0xf]
  %v390 = vld [vmem:[%s3 + $0x30] sm:$0xf]
  %v391 = vld [vmem:[%s3 + $0x34] sm:$0xf]
  %v392 = vld [vmem:[%s3 + $0x38] sm:$0xf]
  %v393 = vld [vmem:[%s3 + $0x3c] sm:$0xf]
  %v394 = vld [vmem:[%s4] sm:$0x1]
  %v396 = vlaneseq
  %v397 = vshrl.u32 %v396, 7
  %v398 = vsub.s32 0, %v397
  %v399 = vrot.slane %v394, %v398
  %v417 = vunpack.c.l.b16 %v378
  %v418 = vunpack.c.l.b16 %v379
  %v419 = vunpack.c.l.b16 %v380
  %v420 = vunpack.c.l.b16 %v381
  %v421 = vunpack.c.l.b16 %v382
  %v422 = vunpack.c.l.b16 %v383
  %v423 = vunpack.c.l.b16 %v384
  %v424 = vunpack.c.l.b16 %v385
  %v425 = vunpack.c.l.b16 %v386
  %v426 = vunpack.c.l.b16 %v387
  %v427 = vunpack.c.l.b16 %v388
  %v428 = vunpack.c.l.b16 %v389
  %v429 = vunpack.c.l.b16 %v390
  %v430 = vunpack.c.l.b16 %v391
  %v431 = vunpack.c.l.b16 %v392
  %v432 = vunpack.c.l.b16 %v393
  %v433 = vpack.c.b16 %v418, %v417
  %v434 = vpack.c.b16 %v420, %v419
  %v435 = vpack.c.b16 %v422, %v421
  %v436 = vpack.c.b16 %v424, %v423
  %v437 = vpack.c.b16 %v426, %v425
  %v438 = vpack.c.b16 %v428, %v427
  %v439 = vpack.c.b16 %v430, %v429
  %v440 = vpack.c.b16 %v432, %v431
  %449 = vmatprep.subr.bf16.mxu0 0
  %450 = vmatpush1.bf16.msra.mxu0 %v440
  %451 = vmatprep.subr.bf16.mxu0 0
  %452 = vmatpush1.bf16.msra.mxu0 %v439
  %453 = vmatprep.subr.bf16.mxu0 0
  %454 = vmatpush1.bf16.msra.mxu0 %v438
  %455 = vmatprep.subr.bf16.mxu0 0
  %456 = vmatpush1.bf16.msra.mxu0 %v437
  %457 = vmatprep.subr.bf16.mxu0 0
  %458 = vmatpush1.bf16.msra.mxu0 %v436
  %459 = vmatprep.subr.bf16.mxu0 0
  %460 = vmatpush1.bf16.msra.mxu0 %v435
  %461 = vmatprep.subr.bf16.mxu0 0
  %462 = vmatpush1.bf16.msra.mxu0 %v434
  %463 = vmatprep.subr.bf16.mxu0 0
  %464 = vmatpush1.bf16.msra.mxu0 %v433
  %465 = vmatprep.subr.bf16.mxu0 0
  %466 = vmatpush2.bf16.msra.mxu0 0
  %467 = vmatprep.subr.bf16.mxu0 0
  %468 = vmatpush2.bf16.msra.mxu0 0
  %469 = vmatprep.subr.bf16.mxu0 0
  %470 = vmatpush2.bf16.msra.mxu0 0
  %471 = vmatprep.subr.bf16.mxu0 0
  %472 = vmatpush2.bf16.msra.mxu0 0
  %473 = vmatprep.subr.bf16.mxu0 0
  %474 = vmatpush2.bf16.msra.mxu0 0
  %475 = vmatprep.subr.bf16.mxu0 0
  %476 = vmatpush2.bf16.msra.mxu0 0
  %477 = vmatprep.subr.bf16.mxu0 0
  %478 = vmatpush2.bf16.msra.mxu0 0
  %479 = vmatprep.subr.bf16.mxu0 0
  %480 = vmatpush2.bf16.msra.mxu0 0
  %481 = vmatprep.mubr.bf16.mxu0 0
  %482 = vmatmul.mubr.bf16.gmra.mxu0 %v362
  %v483 = vpop.f32.mrf.mxu0
  %v484 = vadd.f32 %v399, %v483
  %v485 = vpop.f32.mrf.mxu0
  %v486 = vpop.f32.mrf.mxu0
  %v487 = vadd.f32 %v399, %v486
  %v488 = vpop.f32.mrf.mxu0
  %489 = vmatprep.mubr.bf16.mxu0 0
  %490 = vmatmul.mubr.bf16.gmra.mxu0 %v363
  %v491 = vpop.f32.mrf.mxu0
  %v492 = vadd.f32 %v399, %v491
  %v493 = vpop.f32.mrf.mxu0
  %v494 = vpop.f32.mrf.mxu0
  %v495 = vadd.f32 %v399, %v494
  %v496 = vpop.f32.mrf.mxu0
  %497 = vmatprep.mubr.bf16.mxu0 0
  %498 = vmatmul.mubr.bf16.gmra.mxu0 %v364
  %v499 = vpop.f32.mrf.mxu0
  %v500 = vadd.f32 %v399, %v499
  %v501 = vpop.f32.mrf.mxu0
  %v502 = vpop.f32.mrf.mxu0
  %v503 = vadd.f32 %v399, %v502
  %v504 = vpop.f32.mrf.mxu0
  %505 = vmatprep.mubr.bf16.mxu0 0
  %506 = vmatmul.mubr.bf16.gmra.mxu0 %v365
  %v507 = vpop.f32.mrf.mxu0
  %v508 = vadd.f32 %v399, %v507
  %v509 = vpop.f32.mrf.mxu0
  %v510 = vpop.f32.mrf.mxu0
  %v511 = vadd.f32 %v399, %v510
  %v512 = vpop.f32.mrf.mxu0
  %513 = vmatprep.mubr.bf16.mxu0 0
  %514 = vmatmul.mubr.bf16.gmra.mxu0 %v366
  %v515 = vpop.f32.mrf.mxu0
  %v516 = vadd.f32 %v399, %v515
  %v517 = vpop.f32.mrf.mxu0
  %v518 = vpop.f32.mrf.mxu0
  %v519 = vadd.f32 %v399, %v518
  %v520 = vpop.f32.mrf.mxu0
  %521 = vmatprep.mubr.bf16.mxu0 0
  %522 = vmatmul.mubr.bf16.gmra.mxu0 %v367
  %v523 = vpop.f32.mrf.mxu0
  %v524 = vadd.f32 %v399, %v523
  %v525 = vpop.f32.mrf.mxu0
  %v526 = vpop.f32.mrf.mxu0
  %v527 = vadd.f32 %v399, %v526
  %v528 = vpop.f32.mrf.mxu0
  %529 = vmatprep.mubr.bf16.mxu0 0
  %530 = vmatmul.mubr.bf16.gmra.mxu0 %v368
  %v531 = vpop.f32.mrf.mxu0
  %v532 = vadd.f32 %v399, %v531
  %v533 = vpop.f32.mrf.mxu0
  %v534 = vpop.f32.mrf.mxu0
  %v535 = vadd.f32 %v399, %v534
  %v536 = vpop.f32.mrf.mxu0
  %537 = vmatprep.mubr.bf16.mxu0 0
  %538 = vmatmul.mubr.bf16.gmra.mxu0 %v369
  %v539 = vpop.f32.mrf.mxu0
  %v540 = vadd.f32 %v399, %v539
  %v541 = vpop.f32.mrf.mxu0
  %v542 = vpop.f32.mrf.mxu0
  %v543 = vadd.f32 %v399, %v542
  %v544 = vpop.f32.mrf.mxu0
  %545 = vmatprep.mubr.bf16.mxu0 0
  %546 = vmatmul.mubr.bf16.gmra.mxu0 %v370
  %v547 = vpop.f32.mrf.mxu0
  %v548 = vadd.f32 %v399, %v547
  %v549 = vpop.f32.mrf.mxu0
  %v550 = vpop.f32.mrf.mxu0
  %v551 = vadd.f32 %v399, %v550
  %v552 = vpop.f32.mrf.mxu0
  %553 = vmatprep.mubr.bf16.mxu0 0
  %554 = vmatmul.mubr.bf16.gmra.mxu0 %v371
  %v555 = vpop.f32.mrf.mxu0
  %v556 = vadd.f32 %v399, %v555
  %v557 = vpop.f32.mrf.mxu0
  %v558 = vpop.f32.mrf.mxu0
  %v559 = vadd.f32 %v399, %v558
  %v560 = vpop.f32.mrf.mxu0
  %561 = vmatprep.mubr.bf16.mxu0 0
  %562 = vmatmul.mubr.bf16.gmra.mxu0 %v372
  %v563 = vpop.f32.mrf.mxu0
  %v564 = vadd.f32 %v399, %v563
  %v565 = vpop.f32.mrf.mxu0
  %v566 = vpop.f32.mrf.mxu0
  %v567 = vadd.f32 %v399, %v566
  %v568 = vpop.f32.mrf.mxu0
  %569 = vmatprep.mubr.bf16.mxu0 0
  %570 = vmatmul.mubr.bf16.gmra.mxu0 %v373
  %v571 = vpop.f32.mrf.mxu0
  %v572 = vadd.f32 %v399, %v571
  %v573 = vpop.f32.mrf.mxu0
  %v574 = vpop.f32.mrf.mxu0
  %v575 = vadd.f32 %v399, %v574
  %v576 = vpop.f32.mrf.mxu0
  %577 = vmatprep.mubr.bf16.mxu0 0
  %578 = vmatmul.mubr.bf16.gmra.mxu0 %v374
  %v579 = vpop.f32.mrf.mxu0
  %v580 = vadd.f32 %v399, %v579
  %v581 = vpop.f32.mrf.mxu0
  %v582 = vpop.f32.mrf.mxu0
  %v583 = vadd.f32 %v399, %v582
  %v584 = vpop.f32.mrf.mxu0
  %585 = vmatprep.mubr.bf16.mxu0 0
  %586 = vmatmul.mubr.bf16.gmra.mxu0 %v375
  %v587 = vpop.f32.mrf.mxu0
  %v588 = vadd.f32 %v399, %v587
  %v589 = vpop.f32.mrf.mxu0
  %v590 = vpop.f32.mrf.mxu0
  %v591 = vadd.f32 %v399, %v590
  %v592 = vpop.f32.mrf.mxu0
  %593 = vmatprep.mubr.bf16.mxu0 0
  %594 = vmatmul.mubr.bf16.gmra.mxu0 %v376
  %v595 = vpop.f32.mrf.mxu0
  %v596 = vadd.f32 %v399, %v595
  %v597 = vpop.f32.mrf.mxu0
  %v598 = vpop.f32.mrf.mxu0
  %v599 = vadd.f32 %v399, %v598
  %v600 = vpop.f32.mrf.mxu0
  %601 = vmatprep.mubr.bf16.mxu0 0
  %602 = vmatmul.mubr.bf16.gmra.mxu0 %v377
  %v603 = vpop.f32.mrf.mxu0
  %v604 = vadd.f32 %v399, %v603
  %v605 = vpop.f32.mrf.mxu0
  %v606 = vpop.f32.mrf.mxu0
  %v607 = vadd.f32 %v399, %v606
  %v608 = vpop.f32.mrf.mxu0
  %609 = vdwg.mxu0
  %v610 = vmax.f32 %v484, 0.0
  %v611 = vmax.f32 %v487, 0.0
  %v612 = vmax.f32 %v492, 0.0
  %v613 = vmax.f32 %v495, 0.0
  %v614 = vmax.f32 %v500, 0.0
  %v615 = vmax.f32 %v503, 0.0
  %v616 = vmax.f32 %v508, 0.0
  %v617 = vmax.f32 %v511, 0.0
  %v618 = vmax.f32 %v516, 0.0
  %v619 = vmax.f32 %v519, 0.0
  %v620 = vmax.f32 %v524, 0.0
  %v621 = vmax.f32 %v527, 0.0
  %v622 = vmax.f32 %v532, 0.0
  %v623 = vmax.f32 %v535, 0.0
  %v624 = vmax.f32 %v540, 0.0
  %v625 = vmax.f32 %v543, 0.0
  %v626 = vmax.f32 %v548, 0.0
  %v627 = vmax.f32 %v551, 0.0
  %v628 = vmax.f32 %v556, 0.0
  %v629 = vmax.f32 %v559, 0.0
  %v630 = vmax.f32 %v564, 0.0
  %v631 = vmax.f32 %v567, 0.0
  %v632 = vmax.f32 %v572, 0.0
  %v633 = vmax.f32 %v575, 0.0
  %v634 = vmax.f32 %v580, 0.0
  %v635 = vmax.f32 %v583, 0.0
  %v636 = vmax.f32 %v588, 0.0
  %v637 = vmax.f32 %v591, 0.0
  %v638 = vmax.f32 %v596, 0.0
  %v639 = vmax.f32 %v599, 0.0
  %v640 = vmax.f32 %v604, 0.0
  %v641 = vmax.f32 %v607, 0.0
  %v642 = vpack.c.bf16 %v611, %v610
  %v643 = vpack.c.bf16 %v613, %v612
  %v644 = vpack.c.bf16 %v615, %v614
  %v645 = vpack.c.bf16 %v617, %v616
  %v646 = vpack.c.bf16 %v619, %v618
  %v647 = vpack.c.bf16 %v621, %v620
  %v648 = vpack.c.bf16 %v623, %v622
  %v649 = vpack.c.bf16 %v625, %v624
  %v650 = vpack.c.bf16 %v627, %v626
  %v651 = vpack.c.bf16 %v629, %v628
  %v652 = vpack.c.bf16 %v631, %v630
  %v653 = vpack.c.bf16 %v633, %v632
  %v654 = vpack.c.bf16 %v635, %v634
  %v655 = vpack.c.bf16 %v637, %v636
  %v656 = vpack.c.bf16 %v639, %v638
  %v657 = vpack.c.bf16 %v641, %v640
  %v658 = vld [vmem:[%s5] sm:$0xf]
  %v659 = vld [vmem:[%s5 + $0x4] sm:$0xf]
  %v660 = vld [vmem:[%s5 + $0x8] sm:$0xf]
  %v661 = vld [vmem:[%s5 + $0xc] sm:$0xf]
  %v662 = vld [vmem:[%s5 + $0x10] sm:$0xf]
  %v663 = vld [vmem:[%s5 + $0x14] sm:$0xf]
  %v664 = vld [vmem:[%s5 + $0x18] sm:$0xf]
  %v665 = vld [vmem:[%s5 + $0x1c] sm:$0xf]
  %v666 = vld [vmem:[%s5 + $0x20] sm:$0xf]
  %v667 = vld [vmem:[%s5 + $0x24] sm:$0xf]
  %v668 = vld [vmem:[%s5 + $0x28] sm:$0xf]
  %v669 = vld [vmem:[%s5 + $0x2c] sm:$0xf]
  %v670 = vld [vmem:[%s5 + $0x30] sm:$0xf]
  %v671 = vld [vmem:[%s5 + $0x34] sm:$0xf]
  %v672 = vld [vmem:[%s5 + $0x38] sm:$0xf]
  %v673 = vld [vmem:[%s5 + $0x3c] sm:$0xf]
  %v674 = vld [vmem:[%s6] sm:$0x1]
  %v676 = vlaneseq
  %v677 = vshrl.u32 %v676, 7
  %v678 = vsub.s32 0, %v677
  %v679 = vrot.slane %v674, %v678
  %v697 = vunpack.c.l.b16 %v658
  %v698 = vunpack.c.l.b16 %v659
  %v699 = vunpack.c.l.b16 %v660
  %v700 = vunpack.c.l.b16 %v661
  %v701 = vunpack.c.l.b16 %v662
  %v702 = vunpack.c.l.b16 %v663
  %v703 = vunpack.c.l.b16 %v664
  %v704 = vunpack.c.l.b16 %v665
  %v705 = vunpack.c.l.b16 %v666
  %v706 = vunpack.c.l.b16 %v667
  %v707 = vunpack.c.l.b16 %v668
  %v708 = vunpack.c.l.b16 %v669
  %v709 = vunpack.c.l.b16 %v670
  %v710 = vunpack.c.l.b16 %v671
  %v711 = vunpack.c.l.b16 %v672
  %v712 = vunpack.c.l.b16 %v673
  %v713 = vpack.c.b16 %v698, %v697
  %v714 = vpack.c.b16 %v700, %v699
  %v715 = vpack.c.b16 %v702, %v701
  %v716 = vpack.c.b16 %v704, %v703
  %v717 = vpack.c.b16 %v706, %v705
  %v718 = vpack.c.b16 %v708, %v707
  %v719 = vpack.c.b16 %v710, %v709
  %v720 = vpack.c.b16 %v712, %v711
  %729 = vmatprep.subr.bf16.mxu0 0
  %730 = vmatpush1.bf16.msra.mxu0 %v720
  %731 = vmatprep.subr.bf16.mxu0 0
  %732 = vmatpush1.bf16.msra.mxu0 %v719
  %733 = vmatprep.subr.bf16.mxu0 0
  %734 = vmatpush1.bf16.msra.mxu0 %v718
  %735 = vmatprep.subr.bf16.mxu0 0
  %736 = vmatpush1.bf16.msra.mxu0 %v717
  %737 = vmatprep.subr.bf16.mxu0 0
  %738 = vmatpush1.bf16.msra.mxu0 %v716
  %739 = vmatprep.subr.bf16.mxu0 0
  %740 = vmatpush1.bf16.msra.mxu0 %v715
  %741 = vmatprep.subr.bf16.mxu0 0
  %742 = vmatpush1.bf16.msra.mxu0 %v714
  %743 = vmatprep.subr.bf16.mxu0 0
  %744 = vmatpush1.bf16.msra.mxu0 %v713
  %745 = vmatprep.subr.bf16.mxu0 0
  %746 = vmatpush2.bf16.msra.mxu0 0
  %747 = vmatprep.subr.bf16.mxu0 0
  %748 = vmatpush2.bf16.msra.mxu0 0
  %749 = vmatprep.subr.bf16.mxu0 0
  %750 = vmatpush2.bf16.msra.mxu0 0
  %751 = vmatprep.subr.bf16.mxu0 0
  %752 = vmatpush2.bf16.msra.mxu0 0
  %753 = vmatprep.subr.bf16.mxu0 0
  %754 = vmatpush2.bf16.msra.mxu0 0
  %755 = vmatprep.subr.bf16.mxu0 0
  %756 = vmatpush2.bf16.msra.mxu0 0
  %757 = vmatprep.subr.bf16.mxu0 0
  %758 = vmatpush2.bf16.msra.mxu0 0
  %759 = vmatprep.subr.bf16.mxu0 0
  %760 = vmatpush2.bf16.msra.mxu0 0
  %761 = vmatprep.mubr.bf16.mxu0 0
  %762 = vmatmul.mubr.bf16.gmra.mxu0 %v642
  %v763 = vpop.f32.mrf.mxu0
  %v764 = vadd.f32 %v679, %v763
  %v765 = vpop.f32.mrf.mxu0
  %v766 = vpop.f32.mrf.mxu0
  %v767 = vadd.f32 %v679, %v766
  %v768 = vpop.f32.mrf.mxu0
  %769 = vmatprep.mubr.bf16.mxu0 0
  %770 = vmatmul.mubr.bf16.gmra.mxu0 %v643
  %v771 = vpop.f32.mrf.mxu0
  %v772 = vadd.f32 %v679, %v771
  %v773 = vpop.f32.mrf.mxu0
  %v774 = vpop.f32.mrf.mxu0
  %v775 = vadd.f32 %v679, %v774
  %v776 = vpop.f32.mrf.mxu0
  %777 = vmatprep.mubr.bf16.mxu0 0
  %778 = vmatmul.mubr.bf16.gmra.mxu0 %v644
  %v779 = vpop.f32.mrf.mxu0
  %v780 = vadd.f32 %v679, %v779
  %v781 = vpop.f32.mrf.mxu0
  %v782 = vpop.f32.mrf.mxu0
  %v783 = vadd.f32 %v679, %v782
  %v784 = vpop.f32.mrf.mxu0
  %785 = vmatprep.mubr.bf16.mxu0 0
  %786 = vmatmul.mubr.bf16.gmra.mxu0 %v645
  %v787 = vpop.f32.mrf.mxu0
  %v788 = vadd.f32 %v679, %v787
  %v789 = vpop.f32.mrf.mxu0
  %v790 = vpop.f32.mrf.mxu0
  %v791 = vadd.f32 %v679, %v790
  %v792 = vpop.f32.mrf.mxu0
  %793 = vmatprep.mubr.bf16.mxu0 0
  %794 = vmatmul.mubr.bf16.gmra.mxu0 %v646
  %v795 = vpop.f32.mrf.mxu0
  %v796 = vadd.f32 %v679, %v795
  %v797 = vpop.f32.mrf.mxu0
  %v798 = vpop.f32.mrf.mxu0
  %v799 = vadd.f32 %v679, %v798
  %v800 = vpop.f32.mrf.mxu0
  %801 = vmatprep.mubr.bf16.mxu0 0
  %802 = vmatmul.mubr.bf16.gmra.mxu0 %v647
  %v803 = vpop.f32.mrf.mxu0
  %v804 = vadd.f32 %v679, %v803
  %v805 = vpop.f32.mrf.mxu0
  %v806 = vpop.f32.mrf.mxu0
  %v807 = vadd.f32 %v679, %v806
  %v808 = vpop.f32.mrf.mxu0
  %809 = vmatprep.mubr.bf16.mxu0 0
  %810 = vmatmul.mubr.bf16.gmra.mxu0 %v648
  %v811 = vpop.f32.mrf.mxu0
  %v812 = vadd.f32 %v679, %v811
  %v813 = vpop.f32.mrf.mxu0
  %v814 = vpop.f32.mrf.mxu0
  %v815 = vadd.f32 %v679, %v814
  %v816 = vpop.f32.mrf.mxu0
  %817 = vmatprep.mubr.bf16.mxu0 0
  %818 = vmatmul.mubr.bf16.gmra.mxu0 %v649
  %v819 = vpop.f32.mrf.mxu0
  %v820 = vadd.f32 %v679, %v819
  %v821 = vpop.f32.mrf.mxu0
  %v822 = vpop.f32.mrf.mxu0
  %v823 = vadd.f32 %v679, %v822
  %v824 = vpop.f32.mrf.mxu0
  %825 = vmatprep.mubr.bf16.mxu0 0
  %826 = vmatmul.mubr.bf16.gmra.mxu0 %v650
  %v827 = vpop.f32.mrf.mxu0
  %v828 = vadd.f32 %v679, %v827
  %v829 = vpop.f32.mrf.mxu0
  %v830 = vpop.f32.mrf.mxu0
  %v831 = vadd.f32 %v679, %v830
  %v832 = vpop.f32.mrf.mxu0
  %833 = vmatprep.mubr.bf16.mxu0 0
  %834 = vmatmul.mubr.bf16.gmra.mxu0 %v651
  %v835 = vpop.f32.mrf.mxu0
  %v836 = vadd.f32 %v679, %v835
  %v837 = vpop.f32.mrf.mxu0
  %v838 = vpop.f32.mrf.mxu0
  %v839 = vadd.f32 %v679, %v838
  %v840 = vpop.f32.mrf.mxu0
  %841 = vmatprep.mubr.bf16.mxu0 0
  %842 = vmatmul.mubr.bf16.gmra.mxu0 %v652
  %v843 = vpop.f32.mrf.mxu0
  %v844 = vadd.f32 %v679, %v843
  %v845 = vpop.f32.mrf.mxu0
  %v846 = vpop.f32.mrf.mxu0
  %v847 = vadd.f32 %v679, %v846
  %v848 = vpop.f32.mrf.mxu0
  %849 = vmatprep.mubr.bf16.mxu0 0
  %850 = vmatmul.mubr.bf16.gmra.mxu0 %v653
  %v851 = vpop.f32.mrf.mxu0
  %v852 = vadd.f32 %v679, %v851
  %v853 = vpop.f32.mrf.mxu0
  %v854 = vpop.f32.mrf.mxu0
  %v855 = vadd.f32 %v679, %v854
  %v856 = vpop.f32.mrf.mxu0
  %857 = vmatprep.mubr.bf16.mxu0 0
  %858 = vmatmul.mubr.bf16.gmra.mxu0 %v654
  %v859 = vpop.f32.mrf.mxu0
  %v860 = vadd.f32 %v679, %v859
  %v861 = vpop.f32.mrf.mxu0
  %v862 = vpop.f32.mrf.mxu0
  %v863 = vadd.f32 %v679, %v862
  %v864 = vpop.f32.mrf.mxu0
  %865 = vmatprep.mubr.bf16.mxu0 0
  %866 = vmatmul.mubr.bf16.gmra.mxu0 %v655
  %v867 = vpop.f32.mrf.mxu0
  %v868 = vadd.f32 %v679, %v867
  %v869 = vpop.f32.mrf.mxu0
  %v870 = vpop.f32.mrf.mxu0
  %v871 = vadd.f32 %v679, %v870
  %v872 = vpop.f32.mrf.mxu0
  %873 = vmatprep.mubr.bf16.mxu0 0
  %874 = vmatmul.mubr.bf16.gmra.mxu0 %v656
  %v875 = vpop.f32.mrf.mxu0
  %v876 = vadd.f32 %v679, %v875
  %v877 = vpop.f32.mrf.mxu0
  %v878 = vpop.f32.mrf.mxu0
  %v879 = vadd.f32 %v679, %v878
  %v880 = vpop.f32.mrf.mxu0
  %881 = vmatprep.mubr.bf16.mxu0 0
  %882 = vmatmul.mubr.bf16.gmra.mxu0 %v657
  %v883 = vpop.f32.mrf.mxu0
  %v884 = vadd.f32 %v679, %v883
  %v885 = vpop.f32.mrf.mxu0
  %v886 = vpop.f32.mrf.mxu0
  %v887 = vadd.f32 %v679, %v886
  %v888 = vpop.f32.mrf.mxu0
  %889 = vdwg.mxu0
  %v890 = vmax.f32 %v764, 0.0
  %v891 = vmax.f32 %v767, 0.0
  %v892 = vmax.f32 %v772, 0.0
  %v893 = vmax.f32 %v775, 0.0
  %v894 = vmax.f32 %v780, 0.0
  %v895 = vmax.f32 %v783, 0.0
  %v896 = vmax.f32 %v788, 0.0
  %v897 = vmax.f32 %v791, 0.0
  %v898 = vmax.f32 %v796, 0.0
  %v899 = vmax.f32 %v799, 0.0
  %v900 = vmax.f32 %v804, 0.0
  %v901 = vmax.f32 %v807, 0.0
  %v902 = vmax.f32 %v812, 0.0
  %v903 = vmax.f32 %v815, 0.0
  %v904 = vmax.f32 %v820, 0.0
  %v905 = vmax.f32 %v823, 0.0
  %v906 = vmax.f32 %v828, 0.0
  %v907 = vmax.f32 %v831, 0.0
  %v908 = vmax.f32 %v836, 0.0
  %v909 = vmax.f32 %v839, 0.0
  %v910 = vmax.f32 %v844, 0.0
  %v911 = vmax.f32 %v847, 0.0
  %v912 = vmax.f32 %v852, 0.0
  %v913 = vmax.f32 %v855, 0.0
  %v914 = vmax.f32 %v860, 0.0
  %v915 = vmax.f32 %v863, 0.0
  %v916 = vmax.f32 %v868, 0.0
  %v917 = vmax.f32 %v871, 0.0
  %v918 = vmax.f32 %v876, 0.0
  %v919 = vmax.f32 %v879, 0.0
  %v920 = vmax.f32 %v884, 0.0
  %v921 = vmax.f32 %v887, 0.0
  %v922 = vpack.c.bf16 %v891, %v890
  %v923 = vpack.c.bf16 %v893, %v892
  %v924 = vpack.c.bf16 %v895, %v894
  %v925 = vpack.c.bf16 %v897, %v896
  %v926 = vpack.c.bf16 %v899, %v898
  %v927 = vpack.c.bf16 %v901, %v900
  %v928 = vpack.c.bf16 %v903, %v902
  %v929 = vpack.c.bf16 %v905, %v904
  %v930 = vpack.c.bf16 %v907, %v906
  %v931 = vpack.c.bf16 %v909, %v908
  %v932 = vpack.c.bf16 %v911, %v910
  %v933 = vpack.c.bf16 %v913, %v912
  %v934 = vpack.c.bf16 %v915, %v914
  %v935 = vpack.c.bf16 %v917, %v916
  %v936 = vpack.c.bf16 %v919, %v918
  %v937 = vpack.c.bf16 %v921, %v920
  %v938 = vld [vmem:[%s7] sm:$0xf]
  %v939 = vld [vmem:[%s7 + $0x4] sm:$0xf]
  %v940 = vld [vmem:[%s7 + $0x8] sm:$0xf]
  %v941 = vld [vmem:[%s7 + $0xc] sm:$0xf]
  %v942 = vld [vmem:[%s7 + $0x10] sm:$0xf]
  %v943 = vld [vmem:[%s7 + $0x14] sm:$0xf]
  %v944 = vld [vmem:[%s7 + $0x18] sm:$0xf]
  %v945 = vld [vmem:[%s7 + $0x1c] sm:$0xf]
  %v946 = vld [vmem:[%s7 + $0x20] sm:$0xf]
  %v947 = vld [vmem:[%s7 + $0x24] sm:$0xf]
  %v948 = vld [vmem:[%s7 + $0x28] sm:$0xf]
  %v949 = vld [vmem:[%s7 + $0x2c] sm:$0xf]
  %v950 = vld [vmem:[%s7 + $0x30] sm:$0xf]
  %v951 = vld [vmem:[%s7 + $0x34] sm:$0xf]
  %v952 = vld [vmem:[%s7 + $0x38] sm:$0xf]
  %v953 = vld [vmem:[%s7 + $0x3c] sm:$0xf]
  %v954 = vld [vmem:[%s8] sm:$0x1]
  %v956 = vlaneseq
  %v957 = vshrl.u32 %v956, 7
  %v958 = vsub.s32 0, %v957
  %v959 = vrot.slane %v954, %v958
  %v977 = vunpack.c.l.b16 %v938
  %v978 = vunpack.c.l.b16 %v939
  %v979 = vunpack.c.l.b16 %v940
  %v980 = vunpack.c.l.b16 %v941
  %v981 = vunpack.c.l.b16 %v942
  %v982 = vunpack.c.l.b16 %v943
  %v983 = vunpack.c.l.b16 %v944
  %v984 = vunpack.c.l.b16 %v945
  %v985 = vunpack.c.l.b16 %v946
  %v986 = vunpack.c.l.b16 %v947
  %v987 = vunpack.c.l.b16 %v948
  %v988 = vunpack.c.l.b16 %v949
  %v989 = vunpack.c.l.b16 %v950
  %v990 = vunpack.c.l.b16 %v951
  %v991 = vunpack.c.l.b16 %v952
  %v992 = vunpack.c.l.b16 %v953
  %v993 = vpack.c.b16 %v978, %v977
  %v994 = vpack.c.b16 %v980, %v979
  %v995 = vpack.c.b16 %v982, %v981
  %v996 = vpack.c.b16 %v984, %v983
  %v997 = vpack.c.b16 %v986, %v985
  %v998 = vpack.c.b16 %v988, %v987
  %v999 = vpack.c.b16 %v990, %v989
  %v1000 = vpack.c.b16 %v992, %v991
  %1009 = vmatprep.subr.bf16.mxu0 0
  %1010 = vmatpush1.bf16.msra.mxu0 %v1000
  %1011 = vmatprep.subr.bf16.mxu0 0
  %1012 = vmatpush1.bf16.msra.mxu0 %v999
  %1013 = vmatprep.subr.bf16.mxu0 0
  %1014 = vmatpush1.bf16.msra.mxu0 %v998
  %1015 = vmatprep.subr.bf16.mxu0 0
  %1016 = vmatpush1.bf16.msra.mxu0 %v997
  %1017 = vmatprep.subr.bf16.mxu0 0
  %1018 = vmatpush1.bf16.msra.mxu0 %v996
  %1019 = vmatprep.subr.bf16.mxu0 0
  %1020 = vmatpush1.bf16.msra.mxu0 %v995
  %1021 = vmatprep.subr.bf16.mxu0 0
  %1022 = vmatpush1.bf16.msra.mxu0 %v994
  %1023 = vmatprep.subr.bf16.mxu0 0
  %1024 = vmatpush1.bf16.msra.mxu0 %v993
  %1025 = vmatprep.subr.bf16.mxu0 0
  %1026 = vmatpush2.bf16.msra.mxu0 0
  %1027 = vmatprep.subr.bf16.mxu0 0
  %1028 = vmatpush2.bf16.msra.mxu0 0
  %1029 = vmatprep.subr.bf16.mxu0 0
  %1030 = vmatpush2.bf16.msra.mxu0 0
  %1031 = vmatprep.subr.bf16.mxu0 0
  %1032 = vmatpush2.bf16.msra.mxu0 0
  %1033 = vmatprep.subr.bf16.mxu0 0
  %1034 = vmatpush2.bf16.msra.mxu0 0
  %1035 = vmatprep.subr.bf16.mxu0 0
  %1036 = vmatpush2.bf16.msra.mxu0 0
  %1037 = vmatprep.subr.bf16.mxu0 0
  %1038 = vmatpush2.bf16.msra.mxu0 0
  %1039 = vmatprep.subr.bf16.mxu0 0
  %1040 = vmatpush2.bf16.msra.mxu0 0
  %1041 = vmatprep.mubr.bf16.mxu0 0
  %1042 = vmatmul.mubr.bf16.gmra.mxu0 %v922
  %v1043 = vpop.f32.mrf.mxu0
  %v1044 = vadd.f32 %v959, %v1043
  %v1045 = vpop.f32.mrf.mxu0
  %v1046 = vpop.f32.mrf.mxu0
  %v1047 = vadd.f32 %v959, %v1046
  %v1048 = vpop.f32.mrf.mxu0
  %1049 = vmatprep.mubr.bf16.mxu0 0
  %1050 = vmatmul.mubr.bf16.gmra.mxu0 %v923
  %v1051 = vpop.f32.mrf.mxu0
  %v1052 = vadd.f32 %v959, %v1051
  %v1053 = vpop.f32.mrf.mxu0
  %v1054 = vpop.f32.mrf.mxu0
  %v1055 = vadd.f32 %v959, %v1054
  %v1056 = vpop.f32.mrf.mxu0
  %1057 = vmatprep.mubr.bf16.mxu0 0
  %1058 = vmatmul.mubr.bf16.gmra.mxu0 %v924
  %v1059 = vpop.f32.mrf.mxu0
  %v1060 = vadd.f32 %v959, %v1059
  %v1061 = vpop.f32.mrf.mxu0
  %v1062 = vpop.f32.mrf.mxu0
  %v1063 = vadd.f32 %v959, %v1062
  %v1064 = vpop.f32.mrf.mxu0
  %1065 = vmatprep.mubr.bf16.mxu0 0
  %1066 = vmatmul.mubr.bf16.gmra.mxu0 %v925
  %v1067 = vpop.f32.mrf.mxu0
  %v1068 = vadd.f32 %v959, %v1067
  %v1069 = vpop.f32.mrf.mxu0
  %v1070 = vpop.f32.mrf.mxu0
  %v1071 = vadd.f32 %v959, %v1070
  %v1072 = vpop.f32.mrf.mxu0
  %1073 = vmatprep.mubr.bf16.mxu0 0
  %1074 = vmatmul.mubr.bf16.gmra.mxu0 %v926
  %v1075 = vpop.f32.mrf.mxu0
  %v1076 = vadd.f32 %v959, %v1075
  %v1077 = vpop.f32.mrf.mxu0
  %v1078 = vpop.f32.mrf.mxu0
  %v1079 = vadd.f32 %v959, %v1078
  %v1080 = vpop.f32.mrf.mxu0
  %1081 = vmatprep.mubr.bf16.mxu0 0
  %1082 = vmatmul.mubr.bf16.gmra.mxu0 %v927
  %v1083 = vpop.f32.mrf.mxu0
  %v1084 = vadd.f32 %v959, %v1083
  %v1085 = vpop.f32.mrf.mxu0
  %v1086 = vpop.f32.mrf.mxu0
  %v1087 = vadd.f32 %v959, %v1086
  %v1088 = vpop.f32.mrf.mxu0
  %1089 = vmatprep.mubr.bf16.mxu0 0
  %1090 = vmatmul.mubr.bf16.gmra.mxu0 %v928
  %v1091 = vpop.f32.mrf.mxu0
  %v1092 = vadd.f32 %v959, %v1091
  %v1093 = vpop.f32.mrf.mxu0
  %v1094 = vpop.f32.mrf.mxu0
  %v1095 = vadd.f32 %v959, %v1094
  %v1096 = vpop.f32.mrf.mxu0
  %1097 = vmatprep.mubr.bf16.mxu0 0
  %1098 = vmatmul.mubr.bf16.gmra.mxu0 %v929
  %v1099 = vpop.f32.mrf.mxu0
  %v1100 = vadd.f32 %v959, %v1099
  %v1101 = vpop.f32.mrf.mxu0
  %v1102 = vpop.f32.mrf.mxu0
  %v1103 = vadd.f32 %v959, %v1102
  %v1104 = vpop.f32.mrf.mxu0
  %1105 = vmatprep.mubr.bf16.mxu0 0
  %1106 = vmatmul.mubr.bf16.gmra.mxu0 %v930
  %v1107 = vpop.f32.mrf.mxu0
  %v1108 = vadd.f32 %v959, %v1107
  %v1109 = vpop.f32.mrf.mxu0
  %v1110 = vpop.f32.mrf.mxu0
  %v1111 = vadd.f32 %v959, %v1110
  %v1112 = vpop.f32.mrf.mxu0
  %1113 = vmatprep.mubr.bf16.mxu0 0
  %1114 = vmatmul.mubr.bf16.gmra.mxu0 %v931
  %v1115 = vpop.f32.mrf.mxu0
  %v1116 = vadd.f32 %v959, %v1115
  %v1117 = vpop.f32.mrf.mxu0
  %v1118 = vpop.f32.mrf.mxu0
  %v1119 = vadd.f32 %v959, %v1118
  %v1120 = vpop.f32.mrf.mxu0
  %1121 = vmatprep.mubr.bf16.mxu0 0
  %1122 = vmatmul.mubr.bf16.gmra.mxu0 %v932
  %v1123 = vpop.f32.mrf.mxu0
  %v1124 = vadd.f32 %v959, %v1123
  %v1125 = vpop.f32.mrf.mxu0
  %v1126 = vpop.f32.mrf.mxu0
  %v1127 = vadd.f32 %v959, %v1126
  %v1128 = vpop.f32.mrf.mxu0
  %1129 = vmatprep.mubr.bf16.mxu0 0
  %1130 = vmatmul.mubr.bf16.gmra.mxu0 %v933
  %v1131 = vpop.f32.mrf.mxu0
  %v1132 = vadd.f32 %v959, %v1131
  %v1133 = vpop.f32.mrf.mxu0
  %v1134 = vpop.f32.mrf.mxu0
  %v1135 = vadd.f32 %v959, %v1134
  %v1136 = vpop.f32.mrf.mxu0
  %1137 = vmatprep.mubr.bf16.mxu0 0
  %1138 = vmatmul.mubr.bf16.gmra.mxu0 %v934
  %v1139 = vpop.f32.mrf.mxu0
  %v1140 = vadd.f32 %v959, %v1139
  %v1141 = vpop.f32.mrf.mxu0
  %v1142 = vpop.f32.mrf.mxu0
  %v1143 = vadd.f32 %v959, %v1142
  %v1144 = vpop.f32.mrf.mxu0
  %1145 = vmatprep.mubr.bf16.mxu0 0
  %1146 = vmatmul.mubr.bf16.gmra.mxu0 %v935
  %v1147 = vpop.f32.mrf.mxu0
  %v1148 = vadd.f32 %v959, %v1147
  %v1149 = vpop.f32.mrf.mxu0
  %v1150 = vpop.f32.mrf.mxu0
  %v1151 = vadd.f32 %v959, %v1150
  %v1152 = vpop.f32.mrf.mxu0
  %1153 = vmatprep.mubr.bf16.mxu0 0
  %1154 = vmatmul.mubr.bf16.gmra.mxu0 %v936
  %v1155 = vpop.f32.mrf.mxu0
  %v1156 = vadd.f32 %v959, %v1155
  %v1157 = vpop.f32.mrf.mxu0
  %v1158 = vpop.f32.mrf.mxu0
  %v1159 = vadd.f32 %v959, %v1158
  %v1160 = vpop.f32.mrf.mxu0
  %1161 = vmatprep.mubr.bf16.mxu0 0
  %1162 = vmatmul.mubr.bf16.gmra.mxu0 %v937
  %v1163 = vpop.f32.mrf.mxu0
  %v1164 = vadd.f32 %v959, %v1163
  %v1165 = vpop.f32.mrf.mxu0
  %v1166 = vpop.f32.mrf.mxu0
  %v1167 = vadd.f32 %v959, %v1166
  %v1168 = vpop.f32.mrf.mxu0
  %1169 = vdwg.mxu0
  %1170 = vst.msk [vmem:[%s9] sm:$0xff] %vm120, %v1044
  %1171 = vst.msk [vmem:[%s9 + $0x8] sm:$0xff] %vm120, %v1047
  %1172 = vst.msk [vmem:[%s9 + $0x10] sm:$0xff] %vm120, %v1052
  %1173 = vst.msk [vmem:[%s9 + $0x18] sm:$0xff] %vm120, %v1055
  %1174 = vst.msk [vmem:[%s9 + $0x20] sm:$0xff] %vm120, %v1060
  %1175 = vst.msk [vmem:[%s9 + $0x28] sm:$0xff] %vm120, %v1063
  %1176 = vst.msk [vmem:[%s9 + $0x30] sm:$0xff] %vm120, %v1068
  %1177 = vst.msk [vmem:[%s9 + $0x38] sm:$0xff] %vm120, %v1071
  %1178 = vst.msk [vmem:[%s9 + $0x40] sm:$0xff] %vm120, %v1076
  %1179 = vst.msk [vmem:[%s9 + $0x48] sm:$0xff] %vm120, %v1079
  %1180 = vst.msk [vmem:[%s9 + $0x50] sm:$0xff] %vm120, %v1084
  %1181 = vst.msk [vmem:[%s9 + $0x58] sm:$0xff] %vm120, %v1087
  %1182 = vst.msk [vmem:[%s9 + $0x60] sm:$0xff] %vm120, %v1092
  %1183 = vst.msk [vmem:[%s9 + $0x68] sm:$0xff] %vm120, %v1095
  %1184 = vst.msk [vmem:[%s9 + $0x70] sm:$0xff] %vm120, %v1100
  %1185 = vst.msk [vmem:[%s9 + $0x78] sm:$0xff] %vm120, %v1103
  %1186 = vst.msk [vmem:[%s9 + $0x80] sm:$0xff] %vm120, %v1108
  %1187 = vst.msk [vmem:[%s9 + $0x88] sm:$0xff] %vm120, %v1111
  %1188 = vst.msk [vmem:[%s9 + $0x90] sm:$0xff] %vm120, %v1116
  %1189 = vst.msk [vmem:[%s9 + $0x98] sm:$0xff] %vm120, %v1119
  %1190 = vst.msk [vmem:[%s9 + $0xa0] sm:$0xff] %vm120, %v1124
  %1191 = vst.msk [vmem:[%s9 + $0xa8] sm:$0xff] %vm120, %v1127
  %1192 = vst.msk [vmem:[%s9 + $0xb0] sm:$0xff] %vm120, %v1132
  %1193 = vst.msk [vmem:[%s9 + $0xb8] sm:$0xff] %vm120, %v1135
  %1194 = vst.msk [vmem:[%s9 + $0xc0] sm:$0xff] %vm120, %v1140
  %1195 = vst.msk [vmem:[%s9 + $0xc8] sm:$0xff] %vm120, %v1143
  %1196 = vst.msk [vmem:[%s9 + $0xd0] sm:$0xff] %vm120, %v1148
  %1197 = vst.msk [vmem:[%s9 + $0xd8] sm:$0xff] %vm120, %v1151
  %1198 = vst.msk [vmem:[%s9 + $0xe0] sm:$0xff] %vm120, %v1156
  %1199 = vst.msk [vmem:[%s9 + $0xe8] sm:$0xff] %vm120, %v1159
  %1200 = vst.msk [vmem:[%s9 + $0xf0] sm:$0xff] %vm120, %v1164
  %1201 = vst.msk [vmem:[%s9 + $0xf8] sm:$0xff] %vm120, %v1167
  // Predicated region
  $region38: #{autoencoder_forward.1} parent=0 // pred_check
    _
  $region39: #{autoencoder_forward.1} parent=0 // pred_check_branch
    %1203 = sbr.rel (0) target = $region41
  $region40: #{autoencoder_forward.1} parent=0 // pred_region
    _
  $region41: #{autoencoder_forward.1} parent=0 // pred_fallthru
    _
  // Predicated region
  $region42: #{autoencoder_forward.1} parent=0 // pred_check
    _
  $region43: #{autoencoder_forward.1} parent=0 // pred_check_branch
    %1205 = sbr.rel (0) target = $region45
  $region44: #{autoencoder_forward.1} parent=0 // pred_region
    _
  $region45: #{autoencoder_forward.1} parent=0 // pred_fallthru
    _

// kernel: autoencoder_forward.1
$region0: #{autoencoder_forward.1}
  #allocation0 [shape = 'u32[]', space=smem, size = 0x4, offset = 0x4, fixed_abs, tag = 'smem constant byte address 0x4 - core index']
  #allocation1 [shape = 'u32[144,128]{1,0:T(1,128)}', space=vmem, size = 0x12000, scoped, tag = 'internal scratch']
  %s0 = inlined_call_operand.vmem [shape: f32[256,64], index: 0, kind: input, shape index: {}]
  %s1 = inlined_call_operand.vmem [shape: bf16[64,128], index: 1, kind: input, shape index: {}]
  %s2 = inlined_call_operand.vmem [shape: f32[1,128], index: 2, kind: input, shape index: {}]
  %s3 = inlined_call_operand.vmem [shape: bf16[128,128], index: 3, kind: input, shape index: {}]
  %s4 = inlined_call_operand.vmem [shape: f32[1,128], index: 4, kind: input, shape index: {}]
  %s5 = inlined_call_operand.vmem [shape: bf16[128,128], index: 5, kind: input, shape index: {}]
  %s6 = inlined_call_operand.vmem [shape: f32[1,128], index: 6, kind: input, shape index: {}]
  %s7 = inlined_call_operand.vmem [shape: bf16[128,64], index: 7, kind: input, shape index: {}]
  %s8 = inlined_call_operand.vmem [shape: f32[1,64], index: 8, kind: input, shape index: {}]
  %s9 = inlined_call_operand.vmem [shape: f32[256,64], index: 9, kind: output, shape index: {}]
  %s10 = sld [smem:[#allocation0]]
  $region46: #{autoencoder_forward.1} parent=0
    _
  %s12 = ssub.s32 1, %s10
  %s13 = scalar_select 0, %s12, %s10
  // Predicated region
  $region2: #{autoencoder_forward.1} parent=0 // pred_check
    _
  $region3: #{autoencoder_forward.1} parent=0 // pred_check_branch
    %15 = sbr.rel (0) target = $region5
  $region4: #{autoencoder_forward.1} parent=0 // pred_region
    _
  $region5: #{autoencoder_forward.1} parent=0 // pred_fallthru
    _
  // Predicated region
  $region6: #{autoencoder_forward.1} parent=0 // pred_check
    _
  $region7: #{autoencoder_forward.1} parent=0 // pred_check_branch
    %17 = sbr.rel (0) target = $region9
  $region8: #{autoencoder_forward.1} parent=0 // pred_region
    _
  $region9: #{autoencoder_forward.1} parent=0 // pred_fallthru
    _
  // Predicated region
  $region10: #{autoencoder_forward.1} parent=0 // pred_check
    _
  $region11: #{autoencoder_forward.1} parent=0 // pred_check_branch
    %19 = sbr.rel (0) target = $region13
  $region12: #{autoencoder_forward.1} parent=0 // pred_region
    _
  $region13: #{autoencoder_forward.1} parent=0 // pred_fallthru
    _
  // Predicated region
  $region14: #{autoencoder_forward.1} parent=0 // pred_check
    _
  $region15: #{autoencoder_forward.1} parent=0 // pred_check_branch
    %21 = sbr.rel (0) target = $region17
  $region16: #{autoencoder_forward.1} parent=0 // pred_region
    _
  $region17: #{autoencoder_forward.1} parent=0 // pred_fallthru
    _
  // Predicated region
  $region18: #{autoencoder_forward.1} parent=0 // pred_check
    _
  $region19: #{autoencoder_forward.1} parent=0 // pred_check_branch
    %23 = sbr.rel (0) target = $region21
  $region20: #{autoencoder_forward.1} parent=0 // pred_region
    _
  $region21: #{autoencoder_forward.1} parent=0 // pred_fallthru
    _
  // Predicated region
  $region22: #{autoencoder_forward.1} parent=0 // pred_check
    _
  $region23: #{autoencoder_forward.1} parent=0 // pred_check_branch
    %25 = sbr.rel (0) target = $region25
  $region24: #{autoencoder_forward.1} parent=0 // pred_region
    _
  $region25: #{autoencoder_forward.1} parent=0 // pred_fallthru
    _
  // Predicated region
  $region26: #{autoencoder_forward.1} parent=0 // pred_check
    _
  $region27: #{autoencoder_forward.1} parent=0 // pred_check_branch
    %27 = sbr.rel (0) target = $region29
  $region28: #{autoencoder_forward.1} parent=0 // pred_region
    _
  $region29: #{autoencoder_forward.1} parent=0 // pred_fallthru
    _
  // Predicated region
  $region30: #{autoencoder_forward.1} parent=0 // pred_check
    _
  $region31: #{autoencoder_forward.1} parent=0 // pred_check_branch
    %29 = sbr.rel (0) target = $region33
  $region32: #{autoencoder_forward.1} parent=0 // pred_region
    _
  $region33: #{autoencoder_forward.1} parent=0 // pred_fallthru
    _
  // Predicated region
  $region34: #{autoencoder_forward.1} parent=0 // pred_check
    _
  $region35: #{autoencoder_forward.1} parent=0 // pred_check_branch
    %31 = sbr.rel (0) target = $region37
  $region36: #{autoencoder_forward.1} parent=0 // pred_region
    _
  $region37: #{autoencoder_forward.1} parent=0 // pred_fallthru
    _
  %v33 = vld [vmem:[%s0] sm:$0xff]
  %v34 = vld [vmem:[%s0 + $0x8] sm:$0xff]
  %v35 = vld [vmem:[%s0 + $0x10] sm:$0xff]
  %v36 = vld [vmem:[%s0 + $0x18] sm:$0xff]
  %v37 = vld [vmem:[%s0 + $0x20] sm:$0xff]
  %v38 = vld [vmem:[%s0 + $0x28] sm:$0xff]
  %v39 = vld [vmem:[%s0 + $0x30] sm:$0xff]
  %v40 = vld [vmem:[%s0 + $0x38] sm:$0xff]
  %v41 = vld [vmem:[%s0 + $0x40] sm:$0xff]
  %v42 = vld [vmem:[%s0 + $0x48] sm:$0xff]
  %v43 = vld [vmem:[%s0 + $0x50] sm:$0xff]
  %v44 = vld [vmem:[%s0 + $0x58] sm:$0xff]
  %v45 = vld [vmem:[%s0 + $0x60] sm:$0xff]
  %v46 = vld [vmem:[%s0 + $0x68] sm:$0xff]
  %v47 = vld [vmem:[%s0 + $0x70] sm:$0xff]
  %v48 = vld [vmem:[%s0 + $0x78] sm:$0xff]
  %v49 = vld [vmem:[%s0 + $0x80] sm:$0xff]
  %v50 = vld [vmem:[%s0 + $0x88] sm:$0xff]
  %v51 = vld [vmem:[%s0 + $0x90] sm:$0xff]
  %v52 = vld [vmem:[%s0 + $0x98] sm:$0xff]
  %v53 = vld [vmem:[%s0 + $0xa0] sm:$0xff]
  %v54 = vld [vmem:[%s0 + $0xa8] sm:$0xff]
  %v55 = vld [vmem:[%s0 + $0xb0] sm:$0xff]
  %v56 = vld [vmem:[%s0 + $0xb8] sm:$0xff]
  %v57 = vld [vmem:[%s0 + $0xc0] sm:$0xff]
  %v58 = vld [vmem:[%s0 + $0xc8] sm:$0xff]
  %v59 = vld [vmem:[%s0 + $0xd0] sm:$0xff]
  %v60 = vld [vmem:[%s0 + $0xd8] sm:$0xff]
  %v61 = vld [vmem:[%s0 + $0xe0] sm:$0xff]
  %v62 = vld [vmem:[%s0 + $0xe8] sm:$0xff]
  %v63 = vld [vmem:[%s0 + $0xf0] sm:$0xff]
  %v64 = vld [vmem:[%s0 + $0xf8] sm:$0xff]
  %v65 = vpack.c.bf16 %v34, %v33
  %v66 = vpack.c.bf16 %v36, %v35
  %v67 = vpack.c.bf16 %v38, %v37
  %v68 = vpack.c.bf16 %v40, %v39
  %v69 = vpack.c.bf16 %v42, %v41
  %v70 = vpack.c.bf16 %v44, %v43
  %v71 = vpack.c.bf16 %v46, %v45
  %v72 = vpack.c.bf16 %v48, %v47
  %v73 = vpack.c.bf16 %v50, %v49
  %v74 = vpack.c.bf16 %v52, %v51
  %v75 = vpack.c.bf16 %v54, %v53
  %v76 = vpack.c.bf16 %v56, %v55
  %v77 = vpack.c.bf16 %v58, %v57
  %v78 = vpack.c.bf16 %v60, %v59
  %v79 = vpack.c.bf16 %v62, %v61
  %v80 = vpack.c.bf16 %v64, %v63
  %v81 = vld [vmem:[%s1] sm:$0xf]
  %v82 = vld [vmem:[%s1 + $0x4] sm:$0xf]
  %v83 = vld [vmem:[%s1 + $0x8] sm:$0xf]
  %v84 = vld [vmem:[%s1 + $0xc] sm:$0xf]
  %v85 = vld [vmem:[%s1 + $0x10] sm:$0xf]
  %v86 = vld [vmem:[%s1 + $0x14] sm:$0xf]
  %v87 = vld [vmem:[%s1 + $0x18] sm:$0xf]
  %v88 = vld [vmem:[%s1 + $0x1c] sm:$0xf]
  %v89 = vld [vmem:[%s2] sm:$0x1]
  %v91 = vlaneseq
  %v92 = vshrl.u32 %v91, 7
  %v93 = vsub.s32 0, %v92
  %v94 = vrot.slane %v89, %v93
  %v104 = vunpack.c.l.b16 %v81
  %v105 = vunpack.c.l.b16 %v82
  %v106 = vunpack.c.l.b16 %v83
  %v107 = vunpack.c.l.b16 %v84
  %v108 = vunpack.c.l.b16 %v85
  %v109 = vunpack.c.l.b16 %v86
  %v110 = vunpack.c.l.b16 %v87
  %v111 = vunpack.c.l.b16 %v88
  %v112 = vpack.c.b16 %v105, %v104
  %v113 = vpack.c.b16 %v107, %v106
  %v114 = vpack.c.b16 %v109, %v108
  %v115 = vpack.c.b16 %v111, %v110
  %vm120 = vcmask 523264
  %v122 = vsel %vm120, %v65, 0
  %v125 = vsel %vm120, %v66, 0
  %v128 = vsel %vm120, %v67, 0
  %v131 = vsel %vm120, %v68, 0
  %v134 = vsel %vm120, %v69, 0
  %v137 = vsel %vm120, %v70, 0
  %v140 = vsel %vm120, %v71, 0
  %v143 = vsel %vm120, %v72, 0
  %v146 = vsel %vm120, %v73, 0
  %v149 = vsel %vm120, %v74, 0
  %v152 = vsel %vm120, %v75, 0
  %v155 = vsel %vm120, %v76, 0
  %v158 = vsel %vm120, %v77, 0
  %v161 = vsel %vm120, %v78, 0
  %v164 = vsel %vm120, %v79, 0
  %v167 = vsel %vm120, %v80, 0
  %169 = vmatprep.subr.bf16.mxu0 0
  %170 = vmatpush1.bf16.msra.mxu0 0
  %171 = vmatprep.subr.bf16.mxu0 0
  %172 = vmatpush1.bf16.msra.mxu0 0
  %173 = vmatprep.subr.bf16.mxu0 0
  %174 = vmatpush1.bf16.msra.mxu0 0
  %175 = vmatprep.subr.bf16.mxu0 0
  %176 = vmatpush1.bf16.msra.mxu0 0
  %177 = vmatprep.subr.bf16.mxu0 0
  %178 = vmatpush1.bf16.msra.mxu0 %v115
  %179 = vmatprep.subr.bf16.mxu0 0
  %180 = vmatpush1.bf16.msra.mxu0 %v114
  %181 = vmatprep.subr.bf16.mxu0 0
  %182 = vmatpush1.bf16.msra.mxu0 %v113
  %183 = vmatprep.subr.bf16.mxu0 0
  %184 = vmatpush1.bf16.msra.mxu0 %v112
  %185 = vmatprep.subr.bf16.mxu0 0
  %186 = vmatpush2.bf16.msra.mxu0 0
  %187 = vmatprep.subr.bf16.mxu0 0
  %188 = vmatpush2.bf16.msra.mxu0 0
  %189 = vmatprep.subr.bf16.mxu0 0
  %190 = vmatpush2.bf16.msra.mxu0 0
  %191 = vmatprep.subr.bf16.mxu0 0
  %192 = vmatpush2.bf16.msra.mxu0 0
  %193 = vmatprep.subr.bf16.mxu0 0
  %194 = vmatpush2.bf16.msra.mxu0 0
  %195 = vmatprep.subr.bf16.mxu0 0
  %196 = vmatpush2.bf16.msra.mxu0 0
  %197 = vmatprep.subr.bf16.mxu0 0
  %198 = vmatpush2.bf16.msra.mxu0 0
  %199 = vmatprep.subr.bf16.mxu0 0
  %200 = vmatpush2.bf16.msra.mxu0 0
  %201 = vmatprep.mubr.bf16.mxu0 0
  %202 = vmatmul.mubr.bf16.gmra.mxu0 %v122
  %v203 = vpop.f32.mrf.mxu0
  %v204 = vadd.f32 %v94, %v203
  %v205 = vpop.f32.mrf.mxu0
  %v206 = vpop.f32.mrf.mxu0
  %v207 = vadd.f32 %v94, %v206
  %v208 = vpop.f32.mrf.mxu0
  %209 = vmatprep.mubr.bf16.mxu0 0
  %210 = vmatmul.mubr.bf16.gmra.mxu0 %v125
  %v211 = vpop.f32.mrf.mxu0
  %v212 = vadd.f32 %v94, %v211
  %v213 = vpop.f32.mrf.mxu0
  %v214 = vpop.f32.mrf.mxu0
  %v215 = vadd.f32 %v94, %v214
  %v216 = vpop.f32.mrf.mxu0
  %217 = vmatprep.mubr.bf16.mxu0 0
  %218 = vmatmul.mubr.bf16.gmra.mxu0 %v128
  %v219 = vpop.f32.mrf.mxu0
  %v220 = vadd.f32 %v94, %v219
  %v221 = vpop.f32.mrf.mxu0
  %v222 = vpop.f32.mrf.mxu0
  %v223 = vadd.f32 %v94, %v222
  %v224 = vpop.f32.mrf.mxu0
  %225 = vmatprep.mubr.bf16.mxu0 0
  %226 = vmatmul.mubr.bf16.gmra.mxu0 %v131
  %v227 = vpop.f32.mrf.mxu0
  %v228 = vadd.f32 %v94, %v227
  %v229 = vpop.f32.mrf.mxu0
  %v230 = vpop.f32.mrf.mxu0
  %v231 = vadd.f32 %v94, %v230
  %v232 = vpop.f32.mrf.mxu0
  %233 = vmatprep.mubr.bf16.mxu0 0
  %234 = vmatmul.mubr.bf16.gmra.mxu0 %v134
  %v235 = vpop.f32.mrf.mxu0
  %v236 = vadd.f32 %v94, %v235
  %v237 = vpop.f32.mrf.mxu0
  %v238 = vpop.f32.mrf.mxu0
  %v239 = vadd.f32 %v94, %v238
  %v240 = vpop.f32.mrf.mxu0
  %241 = vmatprep.mubr.bf16.mxu0 0
  %242 = vmatmul.mubr.bf16.gmra.mxu0 %v137
  %v243 = vpop.f32.mrf.mxu0
  %v244 = vadd.f32 %v94, %v243
  %v245 = vpop.f32.mrf.mxu0
  %v246 = vpop.f32.mrf.mxu0
  %v247 = vadd.f32 %v94, %v246
  %v248 = vpop.f32.mrf.mxu0
  %249 = vmatprep.mubr.bf16.mxu0 0
  %250 = vmatmul.mubr.bf16.gmra.mxu0 %v140
  %v251 = vpop.f32.mrf.mxu0
  %v252 = vadd.f32 %v94, %v251
  %v253 = vpop.f32.mrf.mxu0
  %v254 = vpop.f32.mrf.mxu0
  %v255 = vadd.f32 %v94, %v254
  %v256 = vpop.f32.mrf.mxu0
  %257 = vmatprep.mubr.bf16.mxu0 0
  %258 = vmatmul.mubr.bf16.gmra.mxu0 %v143
  %v259 = vpop.f32.mrf.mxu0
  %v260 = vadd.f32 %v94, %v259
  %v261 = vpop.f32.mrf.mxu0
  %v262 = vpop.f32.mrf.mxu0
  %v263 = vadd.f32 %v94, %v262
  %v264 = vpop.f32.mrf.mxu0
  %265 = vmatprep.mubr.bf16.mxu0 0
  %266 = vmatmul.mubr.bf16.gmra.mxu0 %v146
  %v267 = vpop.f32.mrf.mxu0
  %v268 = vadd.f32 %v94, %v267
  %v269 = vpop.f32.mrf.mxu0
  %v270 = vpop.f32.mrf.mxu0
  %v271 = vadd.f32 %v94, %v270
  %v272 = vpop.f32.mrf.mxu0
  %273 = vmatprep.mubr.bf16.mxu0 0
  %274 = vmatmul.mubr.bf16.gmra.mxu0 %v149
  %v275 = vpop.f32.mrf.mxu0
  %v276 = vadd.f32 %v94, %v275
  %v277 = vpop.f32.mrf.mxu0
  %v278 = vpop.f32.mrf.mxu0
  %v279 = vadd.f32 %v94, %v278
  %v280 = vpop.f32.mrf.mxu0
  %281 = vmatprep.mubr.bf16.mxu0 0
  %282 = vmatmul.mubr.bf16.gmra.mxu0 %v152
  %v283 = vpop.f32.mrf.mxu0
  %v284 = vadd.f32 %v94, %v283
  %v285 = vpop.f32.mrf.mxu0
  %v286 = vpop.f32.mrf.mxu0
  %v287 = vadd.f32 %v94, %v286
  %v288 = vpop.f32.mrf.mxu0
  %289 = vmatprep.mubr.bf16.mxu0 0
  %290 = vmatmul.mubr.bf16.gmra.mxu0 %v155
  %v291 = vpop.f32.mrf.mxu0
  %v292 = vadd.f32 %v94, %v291
  %v293 = vpop.f32.mrf.mxu0
  %v294 = vpop.f32.mrf.mxu0
  %v295 = vadd.f32 %v94, %v294
  %v296 = vpop.f32.mrf.mxu0
  %297 = vmatprep.mubr.bf16.mxu0 0
  %298 = vmatmul.mubr.bf16.gmra.mxu0 %v158
  %v299 = vpop.f32.mrf.mxu0
  %v300 = vadd.f32 %v94, %v299
  %v301 = vpop.f32.mrf.mxu0
  %v302 = vpop.f32.mrf.mxu0
  %v303 = vadd.f32 %v94, %v302
  %v304 = vpop.f32.mrf.mxu0
  %305 = vmatprep.mubr.bf16.mxu0 0
  %306 = vmatmul.mubr.bf16.gmra.mxu0 %v161
  %v307 = vpop.f32.mrf.mxu0
  %v308 = vadd.f32 %v94, %v307
  %v309 = vpop.f32.mrf.mxu0
  %v310 = vpop.f32.mrf.mxu0
  %v311 = vadd.f32 %v94, %v310
  %v312 = vpop.f32.mrf.mxu0
  %313 = vmatprep.mubr.bf16.mxu0 0
  %314 = vmatmul.mubr.bf16.gmra.mxu0 %v164
  %v315 = vpop.f32.mrf.mxu0
  %v316 = vadd.f32 %v94, %v315
  %v317 = vpop.f32.mrf.mxu0
  %v318 = vpop.f32.mrf.mxu0
  %v319 = vadd.f32 %v94, %v318
  %v320 = vpop.f32.mrf.mxu0
  %321 = vmatprep.mubr.bf16.mxu0 0
  %322 = vmatmul.mubr.bf16.gmra.mxu0 %v167
  %v323 = vpop.f32.mrf.mxu0
  %v324 = vadd.f32 %v94, %v323
  %v325 = vpop.f32.mrf.mxu0
  %v326 = vpop.f32.mrf.mxu0
  %v327 = vadd.f32 %v94, %v326
  %v328 = vpop.f32.mrf.mxu0
  %329 = vdwg.mxu0
  %v330 = vmax.f32 %v204, 0.0
  %v331 = vmax.f32 %v207, 0.0
  %v332 = vmax.f32 %v212, 0.0
  %v333 = vmax.f32 %v215, 0.0
  %v334 = vmax.f32 %v220, 0.0
  %v335 = vmax.f32 %v223, 0.0
  %v336 = vmax.f32 %v228, 0.0
  %v337 = vmax.f32 %v231, 0.0
  %v338 = vmax.f32 %v236, 0.0
  %v339 = vmax.f32 %v239, 0.0
  %v340 = vmax.f32 %v244, 0.0
  %v341 = vmax.f32 %v247, 0.0
  %v342 = vmax.f32 %v252, 0.0
  %v343 = vmax.f32 %v255, 0.0
  %v344 = vmax.f32 %v260, 0.0
  %v345 = vmax.f32 %v263, 0.0
  %v346 = vmax.f32 %v268, 0.0
  %v347 = vmax.f32 %v271, 0.0
  %v348 = vmax.f32 %v276, 0.0
  %v349 = vmax.f32 %v279, 0.0
  %v350 = vmax.f32 %v284, 0.0
  %v351 = vmax.f32 %v287, 0.0
  %v352 = vmax.f32 %v292, 0.0
  %v353 = vmax.f32 %v295, 0.0
  %v354 = vmax.f32 %v300, 0.0
  %v355 = vmax.f32 %v303, 0.0
  %v356 = vmax.f32 %v308, 0.0
  %v357 = vmax.f32 %v311, 0.0
  %v358 = vmax.f32 %v316, 0.0
  %v359 = vmax.f32 %v319, 0.0
  %v360 = vmax.f32 %v324, 0.0
  %v361 = vmax.f32 %v327, 0.0
  %v362 = vpack.c.bf16 %v331, %v330
  %v363 = vpack.c.bf16 %v333, %v332
  %v364 = vpack.c.bf16 %v335, %v334
  %v365 = vpack.c.bf16 %v337, %v336
  %v366 = vpack.c.bf16 %v339, %v338
  %v367 = vpack.c.bf16 %v341, %v340
  %v368 = vpack.c.bf16 %v343, %v342
  %v369 = vpack.c.bf16 %v345, %v344
  %v370 = vpack.c.bf16 %v347, %v346
  %v371 = vpack.c.bf16 %v349, %v348
  %v372 = vpack.c.bf16 %v351, %v350
  %v373 = vpack.c.bf16 %v353, %v352
  %v374 = vpack.c.bf16 %v355, %v354
  %v375 = vpack.c.bf16 %v357, %v356
  %v376 = vpack.c.bf16 %v359, %v358
  %v377 = vpack.c.bf16 %v361, %v360
  %v378 = vld [vmem:[%s3] sm:$0xf]
  %v379 = vld [vmem:[%s3 + $0x4] sm:$0xf]
  %v380 = vld [vmem:[%s3 + $0x8] sm:$0xf]
  %v381 = vld [vmem:[%s3 + $0xc] sm:$0xf]
  %v382 = vld [vmem:[%s3 + $0x10] sm:$0xf]
  %v383 = vld [vmem:[%s3 + $0x14] sm:$0xf]
  %v384 = vld [vmem:[%s3 + $0x18] sm:$0xf]
  %v385 = vld [vmem:[%s3 + $0x1c] sm:$0xf]
  %v386 = vld [vmem:[%s3 + $0x20] sm:$0xf]
  %v387 = vld [vmem:[%s3 + $0x24] sm:$0xf]
  %v388 = vld [vmem:[%s3 + $0x28] sm:$0xf]
  %v389 = vld [vmem:[%s3 + $0x2c] sm:$0xf]
  %v390 = vld [vmem:[%s3 + $0x30] sm:$0xf]
  %v391 = vld [vmem:[%s3 + $0x34] sm:$0xf]
  %v392 = vld [vmem:[%s3 + $0x38] sm:$0xf]
  %v393 = vld [vmem:[%s3 + $0x3c] sm:$0xf]
  %v394 = vld [vmem:[%s4] sm:$0x1]
  %v396 = vlaneseq
  %v397 = vshrl.u32 %v396, 7
  %v398 = vsub.s32 0, %v397
  %v399 = vrot.slane %v394, %v398
  %v417 = vunpack.c.l.b16 %v378
  %v418 = vunpack.c.l.b16 %v379
  %v419 = vunpack.c.l.b16 %v380
  %v420 = vunpack.c.l.b16 %v381
  %v421 = vunpack.c.l.b16 %v382
  %v422 = vunpack.c.l.b16 %v383
  %v423 = vunpack.c.l.b16 %v384
  %v424 = vunpack.c.l.b16 %v385
  %v425 = vunpack.c.l.b16 %v386
  %v426 = vunpack.c.l.b16 %v387
  %v427 = vunpack.c.l.b16 %v388
  %v428 = vunpack.c.l.b16 %v389
  %v429 = vunpack.c.l.b16 %v390
  %v430 = vunpack.c.l.b16 %v391
  %v431 = vunpack.c.l.b16 %v392
  %v432 = vunpack.c.l.b16 %v393
  %v433 = vpack.c.b16 %v418, %v417
  %v434 = vpack.c.b16 %v420, %v419
  %v435 = vpack.c.b16 %v422, %v421
  %v436 = vpack.c.b16 %v424, %v423
  %v437 = vpack.c.b16 %v426, %v425
  %v438 = vpack.c.b16 %v428, %v427
  %v439 = vpack.c.b16 %v430, %v429
  %v440 = vpack.c.b16 %v432, %v431
  %449 = vmatprep.subr.bf16.mxu0 0
  %450 = vmatpush1.bf16.msra.mxu0 %v440
  %451 = vmatprep.subr.bf16.mxu0 0
  %452 = vmatpush1.bf16.msra.mxu0 %v439
  %453 = vmatprep.subr.bf16.mxu0 0
  %454 = vmatpush1.bf16.msra.mxu0 %v438
  %455 = vmatprep.subr.bf16.mxu0 0
  %456 = vmatpush1.bf16.msra.mxu0 %v437
  %457 = vmatprep.subr.bf16.mxu0 0
  %458 = vmatpush1.bf16.msra.mxu0 %v436
  %459 = vmatprep.subr.bf16.mxu0 0
  %460 = vmatpush1.bf16.msra.mxu0 %v435
  %461 = vmatprep.subr.bf16.mxu0 0
  %462 = vmatpush1.bf16.msra.mxu0 %v434
  %463 = vmatprep.subr.bf16.mxu0 0
  %464 = vmatpush1.bf16.msra.mxu0 %v433
  %465 = vmatprep.subr.bf16.mxu0 0
  %466 = vmatpush2.bf16.msra.mxu0 0
  %467 = vmatprep.subr.bf16.mxu0 0
  %468 = vmatpush2.bf16.msra.mxu0 0
  %469 = vmatprep.subr.bf16.mxu0 0
  %470 = vmatpush2.bf16.msra.mxu0 0
  %471 = vmatprep.subr.bf16.mxu0 0
  %472 = vmatpush2.bf16.msra.mxu0 0
  %473 = vmatprep.subr.bf16.mxu0 0
  %474 = vmatpush2.bf16.msra.mxu0 0
  %475 = vmatprep.subr.bf16.mxu0 0
  %476 = vmatpush2.bf16.msra.mxu0 0
  %477 = vmatprep.subr.bf16.mxu0 0
  %478 = vmatpush2.bf16.msra.mxu0 0
  %479 = vmatprep.subr.bf16.mxu0 0
  %480 = vmatpush2.bf16.msra.mxu0 0
  %481 = vmatprep.mubr.bf16.mxu0 0
  %482 = vmatmul.mubr.bf16.gmra.mxu0 %v362
  %v483 = vpop.f32.mrf.mxu0
  %v484 = vadd.f32 %v399, %v483
  %v485 = vpop.f32.mrf.mxu0
  %v486 = vpop.f32.mrf.mxu0
  %v487 = vadd.f32 %v399, %v486
  %v488 = vpop.f32.mrf.mxu0
  %489 = vmatprep.mubr.bf16.mxu0 0
  %490 = vmatmul.mubr.bf16.gmra.mxu0 %v363
  %v491 = vpop.f32.mrf.mxu0
  %v492 = vadd.f32 %v399, %v491
  %v493 = vpop.f32.mrf.mxu0
  %v494 = vpop.f32.mrf.mxu0
  %v495 = vadd.f32 %v399, %v494
  %v496 = vpop.f32.mrf.mxu0
  %497 = vmatprep.mubr.bf16.mxu0 0
  %498 = vmatmul.mubr.bf16.gmra.mxu0 %v364
  %v499 = vpop.f32.mrf.mxu0
  %v500 = vadd.f32 %v399, %v499
  %v501 = vpop.f32.mrf.mxu0
  %v502 = vpop.f32.mrf.mxu0
  %v503 = vadd.f32 %v399, %v502
  %v504 = vpop.f32.mrf.mxu0
  %505 = vmatprep.mubr.bf16.mxu0 0
  %506 = vmatmul.mubr.bf16.gmra.mxu0 %v365
  %v507 = vpop.f32.mrf.mxu0
  %v508 = vadd.f32 %v399, %v507
  %v509 = vpop.f32.mrf.mxu0
  %v510 = vpop.f32.mrf.mxu0
  %v511 = vadd.f32 %v399, %v510
  %v512 = vpop.f32.mrf.mxu0
  %513 = vmatprep.mubr.bf16.mxu0 0
  %514 = vmatmul.mubr.bf16.gmra.mxu0 %v366
  %v515 = vpop.f32.mrf.mxu0
  %v516 = vadd.f32 %v399, %v515
  %v517 = vpop.f32.mrf.mxu0
  %v518 = vpop.f32.mrf.mxu0
  %v519 = vadd.f32 %v399, %v518
  %v520 = vpop.f32.mrf.mxu0
  %521 = vmatprep.mubr.bf16.mxu0 0
  %522 = vmatmul.mubr.bf16.gmra.mxu0 %v367
  %v523 = vpop.f32.mrf.mxu0
  %v524 = vadd.f32 %v399, %v523
  %v525 = vpop.f32.mrf.mxu0
  %v526 = vpop.f32.mrf.mxu0
  %v527 = vadd.f32 %v399, %v526
  %v528 = vpop.f32.mrf.mxu0
  %529 = vmatprep.mubr.bf16.mxu0 0
  %530 = vmatmul.mubr.bf16.gmra.mxu0 %v368
  %v531 = vpop.f32.mrf.mxu0
  %v532 = vadd.f32 %v399, %v531
  %v533 = vpop.f32.mrf.mxu0
  %v534 = vpop.f32.mrf.mxu0
  %v535 = vadd.f32 %v399, %v534
  %v536 = vpop.f32.mrf.mxu0
  %537 = vmatprep.mubr.bf16.mxu0 0
  %538 = vmatmul.mubr.bf16.gmra.mxu0 %v369
  %v539 = vpop.f32.mrf.mxu0
  %v540 = vadd.f32 %v399, %v539
  %v541 = vpop.f32.mrf.mxu0
  %v542 = vpop.f32.mrf.mxu0
  %v543 = vadd.f32 %v399, %v542
  %v544 = vpop.f32.mrf.mxu0
  %545 = vmatprep.mubr.bf16.mxu0 0
  %546 = vmatmul.mubr.bf16.gmra.mxu0 %v370
  %v547 = vpop.f32.mrf.mxu0
  %v548 = vadd.f32 %v399, %v547
  %v549 = vpop.f32.mrf.mxu0
  %v550 = vpop.f32.mrf.mxu0
  %v551 = vadd.f32 %v399, %v550
  %v552 = vpop.f32.mrf.mxu0
  %553 = vmatprep.mubr.bf16.mxu0 0
  %554 = vmatmul.mubr.bf16.gmra.mxu0 %v371
  %v555 = vpop.f32.mrf.mxu0
  %v556 = vadd.f32 %v399, %v555
  %v557 = vpop.f32.mrf.mxu0
  %v558 = vpop.f32.mrf.mxu0
  %v559 = vadd.f32 %v399, %v558
  %v560 = vpop.f32.mrf.mxu0
  %561 = vmatprep.mubr.bf16.mxu0 0
  %562 = vmatmul.mubr.bf16.gmra.mxu0 %v372
  %v563 = vpop.f32.mrf.mxu0
  %v564 = vadd.f32 %v399, %v563
  %v565 = vpop.f32.mrf.mxu0
  %v566 = vpop.f32.mrf.mxu0
  %v567 = vadd.f32 %v399, %v566
  %v568 = vpop.f32.mrf.mxu0
  %569 = vmatprep.mubr.bf16.mxu0 0
  %570 = vmatmul.mubr.bf16.gmra.mxu0 %v373
  %v571 = vpop.f32.mrf.mxu0
  %v572 = vadd.f32 %v399, %v571
  %v573 = vpop.f32.mrf.mxu0
  %v574 = vpop.f32.mrf.mxu0
  %v575 = vadd.f32 %v399, %v574
  %v576 = vpop.f32.mrf.mxu0
  %577 = vmatprep.mubr.bf16.mxu0 0
  %578 = vmatmul.mubr.bf16.gmra.mxu0 %v374
  %v579 = vpop.f32.mrf.mxu0
  %v580 = vadd.f32 %v399, %v579
  %v581 = vpop.f32.mrf.mxu0
  %v582 = vpop.f32.mrf.mxu0
  %v583 = vadd.f32 %v399, %v582
  %v584 = vpop.f32.mrf.mxu0
  %585 = vmatprep.mubr.bf16.mxu0 0
  %586 = vmatmul.mubr.bf16.gmra.mxu0 %v375
  %v587 = vpop.f32.mrf.mxu0
  %v588 = vadd.f32 %v399, %v587
  %v589 = vpop.f32.mrf.mxu0
  %v590 = vpop.f32.mrf.mxu0
  %v591 = vadd.f32 %v399, %v590
  %v592 = vpop.f32.mrf.mxu0
  %593 = vmatprep.mubr.bf16.mxu0 0
  %594 = vmatmul.mubr.bf16.gmra.mxu0 %v376
  %v595 = vpop.f32.mrf.mxu0
  %v596 = vadd.f32 %v399, %v595
  %v597 = vpop.f32.mrf.mxu0
  %v598 = vpop.f32.mrf.mxu0
  %v599 = vadd.f32 %v399, %v598
  %v600 = vpop.f32.mrf.mxu0
  %601 = vmatprep.mubr.bf16.mxu0 0
  %602 = vmatmul.mubr.bf16.gmra.mxu0 %v377
  %v603 = vpop.f32.mrf.mxu0
  %v604 = vadd.f32 %v399, %v603
  %v605 = vpop.f32.mrf.mxu0
  %v606 = vpop.f32.mrf.mxu0
  %v607 = vadd.f32 %v399, %v606
  %v608 = vpop.f32.mrf.mxu0
  %609 = vdwg.mxu0
  %v610 = vmax.f32 %v484, 0.0
  %v611 = vmax.f32 %v487, 0.0
  %v612 = vmax.f32 %v492, 0.0
  %v613 = vmax.f32 %v495, 0.0
  %v614 = vmax.f32 %v500, 0.0
  %v615 = vmax.f32 %v503, 0.0
  %v616 = vmax.f32 %v508, 0.0
  %v617 = vmax.f32 %v511, 0.0
  %v618 = vmax.f32 %v516, 0.0
  %v619 = vmax.f32 %v519, 0.0
  %v620 = vmax.f32 %v524, 0.0
  %v621 = vmax.f32 %v527, 0.0
  %v622 = vmax.f32 %v532, 0.0
  %v623 = vmax.f32 %v535, 0.0
  %v624 = vmax.f32 %v540, 0.0
  %v625 = vmax.f32 %v543, 0.0
  %v626 = vmax.f32 %v548, 0.0
  %v627 = vmax.f32 %v551, 0.0
  %v628 = vmax.f32 %v556, 0.0
  %v629 = vmax.f32 %v559, 0.0
  %v630 = vmax.f32 %v564, 0.0
  %v631 = vmax.f32 %v567, 0.0
  %v632 = vmax.f32 %v572, 0.0
  %v633 = vmax.f32 %v575, 0.0
  %v634 = vmax.f32 %v580, 0.0
  %v635 = vmax.f32 %v583, 0.0
  %v636 = vmax.f32 %v588, 0.0
  %v637 = vmax.f32 %v591, 0.0
  %v638 = vmax.f32 %v596, 0.0
  %v639 = vmax.f32 %v599, 0.0
  %v640 = vmax.f32 %v604, 0.0
  %v641 = vmax.f32 %v607, 0.0
  %v642 = vpack.c.bf16 %v611, %v610
  %v643 = vpack.c.bf16 %v613, %v612
  %v644 = vpack.c.bf16 %v615, %v614
  %v645 = vpack.c.bf16 %v617, %v616
  %v646 = vpack.c.bf16 %v619, %v618
  %v647 = vpack.c.bf16 %v621, %v620
  %v648 = vpack.c.bf16 %v623, %v622
  %v649 = vpack.c.bf16 %v625, %v624
  %v650 = vpack.c.bf16 %v627, %v626
  %v651 = vpack.c.bf16 %v629, %v628
  %v652 = vpack.c.bf16 %v631, %v630
  %v653 = vpack.c.bf16 %v633, %v632
  %v654 = vpack.c.bf16 %v635, %v634
  %v655 = vpack.c.bf16 %v637, %v636
  %v656 = vpack.c.bf16 %v639, %v638
  %v657 = vpack.c.bf16 %v641, %v640
  %v658 = vld [vmem:[%s5] sm:$0xf]
  %v659 = vld [vmem:[%s5 + $0x4] sm:$0xf]
  %v660 = vld [vmem:[%s5 + $0x8] sm:$0xf]
  %v661 = vld [vmem:[%s5 + $0xc] sm:$0xf]
  %v662 = vld [vmem:[%s5 + $0x10] sm:$0xf]
  %v663 = vld [vmem:[%s5 + $0x14] sm:$0xf]
  %v664 = vld [vmem:[%s5 + $0x18] sm:$0xf]
  %v665 = vld [vmem:[%s5 + $0x1c] sm:$0xf]
  %v666 = vld [vmem:[%s5 + $0x20] sm:$0xf]
  %v667 = vld [vmem:[%s5 + $0x24] sm:$0xf]
  %v668 = vld [vmem:[%s5 + $0x28] sm:$0xf]
  %v669 = vld [vmem:[%s5 + $0x2c] sm:$0xf]
  %v670 = vld [vmem:[%s5 + $0x30] sm:$0xf]
  %v671 = vld [vmem:[%s5 + $0x34] sm:$0xf]
  %v672 = vld [vmem:[%s5 + $0x38] sm:$0xf]
  %v673 = vld [vmem:[%s5 + $0x3c] sm:$0xf]
  %v674 = vld [vmem:[%s6] sm:$0x1]
  %v676 = vlaneseq
  %v677 = vshrl.u32 %v676, 7
  %v678 = vsub.s32 0, %v677
  %v679 = vrot.slane %v674, %v678
  %v697 = vunpack.c.l.b16 %v658
  %v698 = vunpack.c.l.b16 %v659
  %v699 = vunpack.c.l.b16 %v660
  %v700 = vunpack.c.l.b16 %v661
  %v701 = vunpack.c.l.b16 %v662
  %v702 = vunpack.c.l.b16 %v663
  %v703 = vunpack.c.l.b16 %v664
  %v704 = vunpack.c.l.b16 %v665
  %v705 = vunpack.c.l.b16 %v666
  %v706 = vunpack.c.l.b16 %v667
  %v707 = vunpack.c.l.b16 %v668
  %v708 = vunpack.c.l.b16 %v669
  %v709 = vunpack.c.l.b16 %v670
  %v710 = vunpack.c.l.b16 %v671
  %v711 = vunpack.c.l.b16 %v672
  %v712 = vunpack.c.l.b16 %v673
  %v713 = vpack.c.b16 %v698, %v697
  %v714 = vpack.c.b16 %v700, %v699
  %v715 = vpack.c.b16 %v702, %v701
  %v716 = vpack.c.b16 %v704, %v703
  %v717 = vpack.c.b16 %v706, %v705
  %v718 = vpack.c.b16 %v708, %v707
  %v719 = vpack.c.b16 %v710, %v709
  %v720 = vpack.c.b16 %v712, %v711
  %729 = vmatprep.subr.bf16.mxu0 0
  %730 = vmatpush1.bf16.msra.mxu0 %v720
  %731 = vmatprep.subr.bf16.mxu0 0
  %732 = vmatpush1.bf16.msra.mxu0 %v719
  %733 = vmatprep.subr.bf16.mxu0 0
  %734 = vmatpush1.bf16.msra.mxu0 %v718
  %735 = vmatprep.subr.bf16.mxu0 0
  %736 = vmatpush1.bf16.msra.mxu0 %v717
  %737 = vmatprep.subr.bf16.mxu0 0
  %738 = vmatpush1.bf16.msra.mxu0 %v716
  %739 = vmatprep.subr.bf16.mxu0 0
  %740 = vmatpush1.bf16.msra.mxu0 %v715
  %741 = vmatprep.subr.bf16.mxu0 0
  %742 = vmatpush1.bf16.msra.mxu0 %v714
  %743 = vmatprep.subr.bf16.mxu0 0
  %744 = vmatpush1.bf16.msra.mxu0 %v713
  %745 = vmatprep.subr.bf16.mxu0 0
  %746 = vmatpush2.bf16.msra.mxu0 0
  %747 = vmatprep.subr.bf16.mxu0 0
  %748 = vmatpush2.bf16.msra.mxu0 0
  %749 = vmatprep.subr.bf16.mxu0 0
  %750 = vmatpush2.bf16.msra.mxu0 0
  %751 = vmatprep.subr.bf16.mxu0 0
  %752 = vmatpush2.bf16.msra.mxu0 0
  %753 = vmatprep.subr.bf16.mxu0 0
  %754 = vmatpush2.bf16.msra.mxu0 0
  %755 = vmatprep.subr.bf16.mxu0 0
  %756 = vmatpush2.bf16.msra.mxu0 0
  %757 = vmatprep.subr.bf16.mxu0 0
  %758 = vmatpush2.bf16.msra.mxu0 0
  %759 = vmatprep.subr.bf16.mxu0 0
  %760 = vmatpush2.bf16.msra.mxu0 0
  %761 = vmatprep.mubr.bf16.mxu0 0
  %762 = vmatmul.mubr.bf16.gmra.mxu0 %v642
  %v763 = vpop.f32.mrf.mxu0
  %v764 = vadd.f32 %v679, %v763
  %v765 = vpop.f32.mrf.mxu0
  %v766 = vpop.f32.mrf.mxu0
  %v767 = vadd.f32 %v679, %v766
  %v768 = vpop.f32.mrf.mxu0
  %769 = vmatprep.mubr.bf16.mxu0 0
  %770 = vmatmul.mubr.bf16.gmra.mxu0 %v643
  %v771 = vpop.f32.mrf.mxu0
  %v772 = vadd.f32 %v679, %v771
  %v773 = vpop.f32.mrf.mxu0
  %v774 = vpop.f32.mrf.mxu0
  %v775 = vadd.f32 %v679, %v774
  %v776 = vpop.f32.mrf.mxu0
  %777 = vmatprep.mubr.bf16.mxu0 0
  %778 = vmatmul.mubr.bf16.gmra.mxu0 %v644
  %v779 = vpop.f32.mrf.mxu0
  %v780 = vadd.f32 %v679, %v779
  %v781 = vpop.f32.mrf.mxu0
  %v782 = vpop.f32.mrf.mxu0
  %v783 = vadd.f32 %v679, %v782
  %v784 = vpop.f32.mrf.mxu0
  %785 = vmatprep.mubr.bf16.mxu0 0
  %786 = vmatmul.mubr.bf16.gmra.mxu0 %v645
  %v787 = vpop.f32.mrf.mxu0
  %v788 = vadd.f32 %v679, %v787
  %v789 = vpop.f32.mrf.mxu0
  %v790 = vpop.f32.mrf.mxu0
  %v791 = vadd.f32 %v679, %v790
  %v792 = vpop.f32.mrf.mxu0
  %793 = vmatprep.mubr.bf16.mxu0 0
  %794 = vmatmul.mubr.bf16.gmra.mxu0 %v646
  %v795 = vpop.f32.mrf.mxu0
  %v796 = vadd.f32 %v679, %v795
  %v797 = vpop.f32.mrf.mxu0
  %v798 = vpop.f32.mrf.mxu0
  %v799 = vadd.f32 %v679, %v798
  %v800 = vpop.f32.mrf.mxu0
  %801 = vmatprep.mubr.bf16.mxu0 0
  %802 = vmatmul.mubr.bf16.gmra.mxu0 %v647
  %v803 = vpop.f32.mrf.mxu0
  %v804 = vadd.f32 %v679, %v803
  %v805 = vpop.f32.mrf.mxu0
  %v806 = vpop.f32.mrf.mxu0
  %v807 = vadd.f32 %v679, %v806
  %v808 = vpop.f32.mrf.mxu0
  %809 = vmatprep.mubr.bf16.mxu0 0
  %810 = vmatmul.mubr.bf16.gmra.mxu0 %v648
  %v811 = vpop.f32.mrf.mxu0
  %v812 = vadd.f32 %v679, %v811
  %v813 = vpop.f32.mrf.mxu0
  %v814 = vpop.f32.mrf.mxu0
  %v815 = vadd.f32 %v679, %v814
  %v816 = vpop.f32.mrf.mxu0
  %817 = vmatprep.mubr.bf16.mxu0 0
  %818 = vmatmul.mubr.bf16.gmra.mxu0 %v649
  %v819 = vpop.f32.mrf.mxu0
  %v820 = vadd.f32 %v679, %v819
  %v821 = vpop.f32.mrf.mxu0
  %v822 = vpop.f32.mrf.mxu0
  %v823 = vadd.f32 %v679, %v822
  %v824 = vpop.f32.mrf.mxu0
  %825 = vmatprep.mubr.bf16.mxu0 0
  %826 = vmatmul.mubr.bf16.gmra.mxu0 %v650
  %v827 = vpop.f32.mrf.mxu0
  %v828 = vadd.f32 %v679, %v827
  %v829 = vpop.f32.mrf.mxu0
  %v830 = vpop.f32.mrf.mxu0
  %v831 = vadd.f32 %v679, %v830
  %v832 = vpop.f32.mrf.mxu0
  %833 = vmatprep.mubr.bf16.mxu0 0
  %834 = vmatmul.mubr.bf16.gmra.mxu0 %v651
  %v835 = vpop.f32.mrf.mxu0
  %v836 = vadd.f32 %v679, %v835
  %v837 = vpop.f32.mrf.mxu0
  %v838 = vpop.f32.mrf.mxu0
  %v839 = vadd.f32 %v679, %v838
  %v840 = vpop.f32.mrf.mxu0
  %841 = vmatprep.mubr.bf16.mxu0 0
  %842 = vmatmul.mubr.bf16.gmra.mxu0 %v652
  %v843 = vpop.f32.mrf.mxu0
  %v844 = vadd.f32 %v679, %v843
  %v845 = vpop.f32.mrf.mxu0
  %v846 = vpop.f32.mrf.mxu0
  %v847 = vadd.f32 %v679, %v846
  %v848 = vpop.f32.mrf.mxu0
  %849 = vmatprep.mubr.bf16.mxu0 0
  %850 = vmatmul.mubr.bf16.gmra.mxu0 %v653
  %v851 = vpop.f32.mrf.mxu0
  %v852 = vadd.f32 %v679, %v851
  %v853 = vpop.f32.mrf.mxu0
  %v854 = vpop.f32.mrf.mxu0
  %v855 = vadd.f32 %v679, %v854
  %v856 = vpop.f32.mrf.mxu0
  %857 = vmatprep.mubr.bf16.mxu0 0
  %858 = vmatmul.mubr.bf16.gmra.mxu0 %v654
  %v859 = vpop.f32.mrf.mxu0
  %v860 = vadd.f32 %v679, %v859
  %v861 = vpop.f32.mrf.mxu0
  %v862 = vpop.f32.mrf.mxu0
  %v863 = vadd.f32 %v679, %v862
  %v864 = vpop.f32.mrf.mxu0
  %865 = vmatprep.mubr.bf16.mxu0 0
  %866 = vmatmul.mubr.bf16.gmra.mxu0 %v655
  %v867 = vpop.f32.mrf.mxu0
  %v868 = vadd.f32 %v679, %v867
  %v869 = vpop.f32.mrf.mxu0
  %v870 = vpop.f32.mrf.mxu0
  %v871 = vadd.f32 %v679, %v870
  %v872 = vpop.f32.mrf.mxu0
  %873 = vmatprep.mubr.bf16.mxu0 0
  %874 = vmatmul.mubr.bf16.gmra.mxu0 %v656
  %v875 = vpop.f32.mrf.mxu0
  %v876 = vadd.f32 %v679, %v875
  %v877 = vpop.f32.mrf.mxu0
  %v878 = vpop.f32.mrf.mxu0
  %v879 = vadd.f32 %v679, %v878
  %v880 = vpop.f32.mrf.mxu0
  %881 = vmatprep.mubr.bf16.mxu0 0
  %882 = vmatmul.mubr.bf16.gmra.mxu0 %v657
  %v883 = vpop.f32.mrf.mxu0
  %v884 = vadd.f32 %v679, %v883
  %v885 = vpop.f32.mrf.mxu0
  %v886 = vpop.f32.mrf.mxu0
  %v887 = vadd.f32 %v679, %v886
  %v888 = vpop.f32.mrf.mxu0
  %889 = vdwg.mxu0
  %v890 = vmax.f32 %v764, 0.0
  %v891 = vmax.f32 %v767, 0.0
  %v892 = vmax.f32 %v772, 0.0
  %v893 = vmax.f32 %v775, 0.0
  %v894 = vmax.f32 %v780, 0.0
  %v895 = vmax.f32 %v783, 0.0
  %v896 = vmax.f32 %v788, 0.0
  %v897 = vmax.f32 %v791, 0.0
  %v898 = vmax.f32 %v796, 0.0
  %v899 = vmax.f32 %v799, 0.0
  %v900 = vmax.f32 %v804, 0.0
  %v901 = vmax.f32 %v807, 0.0
  %v902 = vmax.f32 %v812, 0.0
  %v903 = vmax.f32 %v815, 0.0
  %v904 = vmax.f32 %v820, 0.0
  %v905 = vmax.f32 %v823, 0.0
  %v906 = vmax.f32 %v828, 0.0
  %v907 = vmax.f32 %v831, 0.0
  %v908 = vmax.f32 %v836, 0.0
  %v909 = vmax.f32 %v839, 0.0
  %v910 = vmax.f32 %v844, 0.0
  %v911 = vmax.f32 %v847, 0.0
  %v912 = vmax.f32 %v852, 0.0
  %v913 = vmax.f32 %v855, 0.0
  %v914 = vmax.f32 %v860, 0.0
  %v915 = vmax.f32 %v863, 0.0
  %v916 = vmax.f32 %v868, 0.0
  %v917 = vmax.f32 %v871, 0.0
  %v918 = vmax.f32 %v876, 0.0
  %v919 = vmax.f32 %v879, 0.0
  %v920 = vmax.f32 %v884, 0.0
  %v921 = vmax.f32 %v887, 0.0
  %v922 = vpack.c.bf16 %v891, %v890
  %v923 = vpack.c.bf16 %v893, %v892
  %v924 = vpack.c.bf16 %v895, %v894
  %v925 = vpack.c.bf16 %v897, %v896
  %v926 = vpack.c.bf16 %v899, %v898
  %v927 = vpack.c.bf16 %v901, %v900
  %v928 = vpack.c.bf16 %v903, %v902
  %v929 = vpack.c.bf16 %v905, %v904
  %v930 = vpack.c.bf16 %v907, %v906
  %v931 = vpack.c.bf16 %v909, %v908
  %v932 = vpack.c.bf16 %v911, %v910
  %v933 = vpack.c.bf16 %v913, %v912
  %v934 = vpack.c.bf16 %v915, %v914
  %v935 = vpack.c.bf16 %v917, %v916
  %v936 = vpack.c.bf16 %v919, %v918
  %v937 = vpack.c.bf16 %v921, %v920
  %v938 = vld [vmem:[%s7] sm:$0xf]
  %v939 = vld [vmem:[%s7 + $0x4] sm:$0xf]
  %v940 = vld [vmem:[%s7 + $0x8] sm:$0xf]
  %v941 = vld [vmem:[%s7 + $0xc] sm:$0xf]
  %v942 = vld [vmem:[%s7 + $0x10] sm:$0xf]
  %v943 = vld [vmem:[%s7 + $0x14] sm:$0xf]
  %v944 = vld [vmem:[%s7 + $0x18] sm:$0xf]
  %v945 = vld [vmem:[%s7 + $0x1c] sm:$0xf]
  %v946 = vld [vmem:[%s7 + $0x20] sm:$0xf]
  %v947 = vld [vmem:[%s7 + $0x24] sm:$0xf]
  %v948 = vld [vmem:[%s7 + $0x28] sm:$0xf]
  %v949 = vld [vmem:[%s7 + $0x2c] sm:$0xf]
  %v950 = vld [vmem:[%s7 + $0x30] sm:$0xf]
  %v951 = vld [vmem:[%s7 + $0x34] sm:$0xf]
  %v952 = vld [vmem:[%s7 + $0x38] sm:$0xf]
  %v953 = vld [vmem:[%s7 + $0x3c] sm:$0xf]
  %v954 = vld [vmem:[%s8] sm:$0x1]
  %v956 = vlaneseq
  %v957 = vshrl.u32 %v956, 7
  %v958 = vsub.s32 0, %v957
  %v959 = vrot.slane %v954, %v958
  %v977 = vunpack.c.l.b16 %v938
  %v978 = vunpack.c.l.b16 %v939
  %v979 = vunpack.c.l.b16 %v940
  %v980 = vunpack.c.l.b16 %v941
  %v981 = vunpack.c.l.b16 %v942
  %v982 = vunpack.c.l.b16 %v943
  %v983 = vunpack.c.l.b16 %v944
  %v984 = vunpack.c.l.b16 %v945
  %v985 = vunpack.c.l.b16 %v946
  %v986 = vunpack.c.l.b16 %v947
  %v987 = vunpack.c.l.b16 %v948
  %v988 = vunpack.c.l.b16 %v949
  %v989 = vunpack.c.l.b16 %v950
  %v990 = vunpack.c.l.b16 %v951
  %v991 = vunpack.c.l.b16 %v952
  %v992 = vunpack.c.l.b16 %v953
  %v993 = vpack.c.b16 %v978, %v977
  %v994 = vpack.c.b16 %v980, %v979
  %v995 = vpack.c.b16 %v982, %v981
  %v996 = vpack.c.b16 %v984, %v983
  %v997 = vpack.c.b16 %v986, %v985
  %v998 = vpack.c.b16 %v988, %v987
  %v999 = vpack.c.b16 %v990, %v989
  %v1000 = vpack.c.b16 %v992, %v991
  %1009 = vmatprep.subr.bf16.mxu0 0
  %1010 = vmatpush1.bf16.msra.mxu0 %v1000
  %1011 = vmatprep.subr.bf16.mxu0 0
  %1012 = vmatpush1.bf16.msra.mxu0 %v999
  %1013 = vmatprep.subr.bf16.mxu0 0
  %1014 = vmatpush1.bf16.msra.mxu0 %v998
  %1015 = vmatprep.subr.bf16.mxu0 0
  %1016 = vmatpush1.bf16.msra.mxu0 %v997
  %1017 = vmatprep.subr.bf16.mxu0 0
  %1018 = vmatpush1.bf16.msra.mxu0 %v996
  %1019 = vmatprep.subr.bf16.mxu0 0
  %1020 = vmatpush1.bf16.msra.mxu0 %v995
  %1021 = vmatprep.subr.bf16.mxu0 0
  %1022 = vmatpush1.bf16.msra.mxu0 %v994
  %1023 = vmatprep.subr.bf16.mxu0 0
  %1024 = vmatpush1.bf16.msra.mxu0 %v993
  %1025 = vmatprep.subr.bf16.mxu0 0
  %1026 = vmatpush2.bf16.msra.mxu0 0
  %1027 = vmatprep.subr.bf16.mxu0 0
  %1028 = vmatpush2.bf16.msra.mxu0 0
  %1029 = vmatprep.subr.bf16.mxu0 0
  %1030 = vmatpush2.bf16.msra.mxu0 0
  %1031 = vmatprep.subr.bf16.mxu0 0
  %1032 = vmatpush2.bf16.msra.mxu0 0
  %1033 = vmatprep.subr.bf16.mxu0 0
  %1034 = vmatpush2.bf16.msra.mxu0 0
  %1035 = vmatprep.subr.bf16.mxu0 0
  %1036 = vmatpush2.bf16.msra.mxu0 0
  %1037 = vmatprep.subr.bf16.mxu0 0
  %1038 = vmatpush2.bf16.msra.mxu0 0
  %1039 = vmatprep.subr.bf16.mxu0 0
  %1040 = vmatpush2.bf16.msra.mxu0 0
  %1041 = vmatprep.mubr.bf16.mxu0 0
  %1042 = vmatmul.mubr.bf16.gmra.mxu0 %v922
  %v1043 = vpop.f32.mrf.mxu0
  %v1044 = vadd.f32 %v959, %v1043
  %v1045 = vpop.f32.mrf.mxu0
  %v1046 = vpop.f32.mrf.mxu0
  %v1047 = vadd.f32 %v959, %v1046
  %v1048 = vpop.f32.mrf.mxu0
  %1049 = vmatprep.mubr.bf16.mxu0 0
  %1050 = vmatmul.mubr.bf16.gmra.mxu0 %v923
  %v1051 = vpop.f32.mrf.mxu0
  %v1052 = vadd.f32 %v959, %v1051
  %v1053 = vpop.f32.mrf.mxu0
  %v1054 = vpop.f32.mrf.mxu0
  %v1055 = vadd.f32 %v959, %v1054
  %v1056 = vpop.f32.mrf.mxu0
  %1057 = vmatprep.mubr.bf16.mxu0 0
  %1058 = vmatmul.mubr.bf16.gmra.mxu0 %v924
  %v1059 = vpop.f32.mrf.mxu0
  %v1060 = vadd.f32 %v959, %v1059
  %v1061 = vpop.f32.mrf.mxu0
  %v1062 = vpop.f32.mrf.mxu0
  %v1063 = vadd.f32 %v959, %v1062
  %v1064 = vpop.f32.mrf.mxu0
  %1065 = vmatprep.mubr.bf16.mxu0 0
  %1066 = vmatmul.mubr.bf16.gmra.mxu0 %v925
  %v1067 = vpop.f32.mrf.mxu0
  %v1068 = vadd.f32 %v959, %v1067
  %v1069 = vpop.f32.mrf.mxu0
  %v1070 = vpop.f32.mrf.mxu0
  %v1071 = vadd.f32 %v959, %v1070
  %v1072 = vpop.f32.mrf.mxu0
  %1073 = vmatprep.mubr.bf16.mxu0 0
  %1074 = vmatmul.mubr.bf16.gmra.mxu0 %v926
  %v1075 = vpop.f32.mrf.mxu0
  %v1076 = vadd.f32 %v959, %v1075
  %v1077 = vpop.f32.mrf.mxu0
  %v1078 = vpop.f32.mrf.mxu0
  %v1079 = vadd.f32 %v959, %v1078
  %v1080 = vpop.f32.mrf.mxu0
  %1081 = vmatprep.mubr.bf16.mxu0 0
  %1082 = vmatmul.mubr.bf16.gmra.mxu0 %v927
  %v1083 = vpop.f32.mrf.mxu0
  %v1084 = vadd.f32 %v959, %v1083
  %v1085 = vpop.f32.mrf.mxu0
  %v1086 = vpop.f32.mrf.mxu0
  %v1087 = vadd.f32 %v959, %v1086
  %v1088 = vpop.f32.mrf.mxu0
  %1089 = vmatprep.mubr.bf16.mxu0 0
  %1090 = vmatmul.mubr.bf16.gmra.mxu0 %v928
  %v1091 = vpop.f32.mrf.mxu0
  %v1092 = vadd.f32 %v959, %v1091
  %v1093 = vpop.f32.mrf.mxu0
  %v1094 = vpop.f32.mrf.mxu0
  %v1095 = vadd.f32 %v959, %v1094
  %v1096 = vpop.f32.mrf.mxu0
  %1097 = vmatprep.mubr.bf16.mxu0 0
  %1098 = vmatmul.mubr.bf16.gmra.mxu0 %v929
  %v1099 = vpop.f32.mrf.mxu0
  %v1100 = vadd.f32 %v959, %v1099
  %v1101 = vpop.f32.mrf.mxu0
  %v1102 = vpop.f32.mrf.mxu0
  %v1103 = vadd.f32 %v959, %v1102
  %v1104 = vpop.f32.mrf.mxu0
  %1105 = vmatprep.mubr.bf16.mxu0 0
  %1106 = vmatmul.mubr.bf16.gmra.mxu0 %v930
  %v1107 = vpop.f32.mrf.mxu0
  %v1108 = vadd.f32 %v959, %v1107
  %v1109 = vpop.f32.mrf.mxu0
  %v1110 = vpop.f32.mrf.mxu0
  %v1111 = vadd.f32 %v959, %v1110
  %v1112 = vpop.f32.mrf.mxu0
  %1113 = vmatprep.mubr.bf16.mxu0 0
  %1114 = vmatmul.mubr.bf16.gmra.mxu0 %v931
  %v1115 = vpop.f32.mrf.mxu0
  %v1116 = vadd.f32 %v959, %v1115
  %v1117 = vpop.f32.mrf.mxu0
  %v1118 = vpop.f32.mrf.mxu0
  %v1119 = vadd.f32 %v959, %v1118
  %v1120 = vpop.f32.mrf.mxu0
  %1121 = vmatprep.mubr.bf16.mxu0 0
  %1122 = vmatmul.mubr.bf16.gmra.mxu0 %v932
  %v1123 = vpop.f32.mrf.mxu0
  %v1124 = vadd.f32 %v959, %v1123
  %v1125 = vpop.f32.mrf.mxu0
  %v1126 = vpop.f32.mrf.mxu0
  %v1127 = vadd.f32 %v959, %v1126
  %v1128 = vpop.f32.mrf.mxu0
  %1129 = vmatprep.mubr.bf16.mxu0 0
  %1130 = vmatmul.mubr.bf16.gmra.mxu0 %v933
  %v1131 = vpop.f32.mrf.mxu0
  %v1132 = vadd.f32 %v959, %v1131
  %v1133 = vpop.f32.mrf.mxu0
  %v1134 = vpop.f32.mrf.mxu0
  %v1135 = vadd.f32 %v959, %v1134
  %v1136 = vpop.f32.mrf.mxu0
  %1137 = vmatprep.mubr.bf16.mxu0 0
  %1138 = vmatmul.mubr.bf16.gmra.mxu0 %v934
  %v1139 = vpop.f32.mrf.mxu0
  %v1140 = vadd.f32 %v959, %v1139
  %v1141 = vpop.f32.mrf.mxu0
  %v1142 = vpop.f32.mrf.mxu0
  %v1143 = vadd.f32 %v959, %v1142
  %v1144 = vpop.f32.mrf.mxu0
  %1145 = vmatprep.mubr.bf16.mxu0 0
  %1146 = vmatmul.mubr.bf16.gmra.mxu0 %v935
  %v1147 = vpop.f32.mrf.mxu0
  %v1148 = vadd.f32 %v959, %v1147
  %v1149 = vpop.f32.mrf.mxu0
  %v1150 = vpop.f32.mrf.mxu0
  %v1151 = vadd.f32 %v959, %v1150
  %v1152 = vpop.f32.mrf.mxu0
  %1153 = vmatprep.mubr.bf16.mxu0 0
  %1154 = vmatmul.mubr.bf16.gmra.mxu0 %v936
  %v1155 = vpop.f32.mrf.mxu0
  %v1156 = vadd.f32 %v959, %v1155
  %v1157 = vpop.f32.mrf.mxu0
  %v1158 = vpop.f32.mrf.mxu0
  %v1159 = vadd.f32 %v959, %v1158
  %v1160 = vpop.f32.mrf.mxu0
  %1161 = vmatprep.mubr.bf16.mxu0 0
  %1162 = vmatmul.mubr.bf16.gmra.mxu0 %v937
  %v1163 = vpop.f32.mrf.mxu0
  %v1164 = vadd.f32 %v959, %v1163
  %v1165 = vpop.f32.mrf.mxu0
  %v1166 = vpop.f32.mrf.mxu0
  %v1167 = vadd.f32 %v959, %v1166
  %v1168 = vpop.f32.mrf.mxu0
  %1169 = vdwg.mxu0
  %1170 = vst.msk [vmem:[%s9] sm:$0xff] %vm120, %v1044
  %1171 = vst.msk [vmem:[%s9 + $0x8] sm:$0xff] %vm120, %v1047
  %1172 = vst.msk [vmem:[%s9 + $0x10] sm:$0xff] %vm120, %v1052
  %1173 = vst.msk [vmem:[%s9 + $0x18] sm:$0xff] %vm120, %v1055
  %1174 = vst.msk [vmem:[%s9 + $0x20] sm:$0xff] %vm120, %v1060
  %1175 = vst.msk [vmem:[%s9 + $0x28] sm:$0xff] %vm120, %v1063
  %1176 = vst.msk [vmem:[%s9 + $0x30] sm:$0xff] %vm120, %v1068
  %1177 = vst.msk [vmem:[%s9 + $0x38] sm:$0xff] %vm120, %v1071
  %1178 = vst.msk [vmem:[%s9 + $0x40] sm:$0xff] %vm120, %v1076
  %1179 = vst.msk [vmem:[%s9 + $0x48] sm:$0xff] %vm120, %v1079
  %1180 = vst.msk [vmem:[%s9 + $0x50] sm:$0xff] %vm120, %v1084
  %1181 = vst.msk [vmem:[%s9 + $0x58] sm:$0xff] %vm120, %v1087
  %1182 = vst.msk [vmem:[%s9 + $0x60] sm:$0xff] %vm120, %v1092
  %1183 = vst.msk [vmem:[%s9 + $0x68] sm:$0xff] %vm120, %v1095
  %1184 = vst.msk [vmem:[%s9 + $0x70] sm:$0xff] %vm120, %v1100
  %1185 = vst.msk [vmem:[%s9 + $0x78] sm:$0xff] %vm120, %v1103
  %1186 = vst.msk [vmem:[%s9 + $0x80] sm:$0xff] %vm120, %v1108
  %1187 = vst.msk [vmem:[%s9 + $0x88] sm:$0xff] %vm120, %v1111
  %1188 = vst.msk [vmem:[%s9 + $0x90] sm:$0xff] %vm120, %v1116
  %1189 = vst.msk [vmem:[%s9 + $0x98] sm:$0xff] %vm120, %v1119
  %1190 = vst.msk [vmem:[%s9 + $0xa0] sm:$0xff] %vm120, %v1124
  %1191 = vst.msk [vmem:[%s9 + $0xa8] sm:$0xff] %vm120, %v1127
  %1192 = vst.msk [vmem:[%s9 + $0xb0] sm:$0xff] %vm120, %v1132
  %1193 = vst.msk [vmem:[%s9 + $0xb8] sm:$0xff] %vm120, %v1135
  %1194 = vst.msk [vmem:[%s9 + $0xc0] sm:$0xff] %vm120, %v1140
  %1195 = vst.msk [vmem:[%s9 + $0xc8] sm:$0xff] %vm120, %v1143
  %1196 = vst.msk [vmem:[%s9 + $0xd0] sm:$0xff] %vm120, %v1148
  %1197 = vst.msk [vmem:[%s9 + $0xd8] sm:$0xff] %vm120, %v1151
  %1198 = vst.msk [vmem:[%s9 + $0xe0] sm:$0xff] %vm120, %v1156
  %1199 = vst.msk [vmem:[%s9 + $0xe8] sm:$0xff] %vm120, %v1159
  %1200 = vst.msk [vmem:[%s9 + $0xf0] sm:$0xff] %vm120, %v1164
  %1201 = vst.msk [vmem:[%s9 + $0xf8] sm:$0xff] %vm120, %v1167
  // Predicated region
  $region38: #{autoencoder_forward.1} parent=0 // pred_check
    _
  $region39: #{autoencoder_forward.1} parent=0 // pred_check_branch
    %1203 = sbr.rel (0) target = $region41
  $region40: #{autoencoder_forward.1} parent=0 // pred_region
    _
  $region41: #{autoencoder_forward.1} parent=0 // pred_fallthru
    _
  // Predicated region
  $region42: #{autoencoder_forward.1} parent=0 // pred_check
    _
  $region43: #{autoencoder_forward.1} parent=0 // pred_check_branch
    %1205 = sbr.rel (0) target = $region45
  $region44: #{autoencoder_forward.1} parent=0 // pred_region
    _
  $region45: #{autoencoder_forward.1} parent=0 // pred_fallthru
    _

</llo_original>
